<compile_context>
chip_gen: v7x
topology: tpu7x:2x2x1
jax: 0.10.0
libtpu: 0.0.40
codegen_flags: <defaults>
</compile_context>

<pallas_src>
import jax
import jax.numpy as jnp
from jax.experimental import pallas as pl
from jax.experimental.pallas import tpu as pltpu

IMG_H, IMG_W, IMG_C = 32, 32, 3
IN_DIM = IMG_H * IMG_W * IMG_C            # 3072
HIDDEN = 32
CLASSES = 100

HID_PAD = 128                              # lane-dense padded hidden width
CLS_PAD = 128                              # lane-dense padded logits width
DEFAULT_TB = 1024                          # batch tile (6 MiB bf16 x-tile)

CIFAR_MEAN = (0.5074, 0.4867, 0.4411)
CIFAR_STD = (0.2011, 0.1987, 0.2025)


def _mlp_kernel(x_ref, w1_ref, b1_ref, w2_ref, b2_ref, o_ref):
    # Widen the bf16-streamed activations to f32 (single VPU convert); the Normalize
    # op is pre-folded into w1/b1 so this is the only non-matmul work.
    x = x_ref[...].astype(jnp.float32)
    h = jnp.dot(x, w1_ref[...], preferred_element_type=jnp.float32)
    h = jnp.maximum(h + b1_ref[...], 0.0)
    o_ref[...] = (
        jnp.dot(h, w2_ref[...], preferred_element_type=jnp.float32) + b2_ref[...]
    )


def _round_up(n, m):
    return ((n + m - 1) // m) * m


def _fold_and_pad_params(params):
    """Fold the Normalize op into fc1 and zero-pad lane dims to 128 (all f32)."""
    w1, b1, w2, b2 = params  # (3072,32), (32,), (32,100), (100,)

    # Channel-fastest tiling matches torch.flatten on the (B,32,32,3) NHWC input.
    mean_vec = jnp.tile(jnp.asarray(CIFAR_MEAN, jnp.float32), IMG_H * IMG_W)  # (3072,)
    std_vec = jnp.tile(jnp.asarray(CIFAR_STD, jnp.float32), IMG_H * IMG_W)    # (3072,)
    scale = 1.0 / (255.0 * std_vec)        # x/255/std == x * scale
    offset = -mean_vec / std_vec           # constant additive part

    w1f = w1 * scale[:, None]              # (3072, 32)
    b1f = offset @ w1 + b1                 # (32,)

    w1p = jnp.zeros((IN_DIM, HID_PAD), jnp.float32).at[:, :HIDDEN].set(w1f)
    b1p = jnp.zeros((1, HID_PAD), jnp.float32).at[0, :HIDDEN].set(b1f)
    w2p = jnp.zeros((HID_PAD, CLS_PAD), jnp.float32).at[:HIDDEN, :CLASSES].set(w2)
    b2p = jnp.zeros((1, CLS_PAD), jnp.float32).at[0, :CLASSES].set(b2)
    return w1p, b1p, w2p, b2p


def cifar100_mlp_forward(x_nhwc, params, *, tb=DEFAULT_TB, stream_dtype=jnp.bfloat16):
    """x_nhwc: (B, 32, 32, 3) float pixel values. Returns (B, 100) float32 logits.

    stream_dtype=bf16 is exact for integer pixel values in [0, 255]; pass
    jnp.float32 if the input holds already-normalized / non-integer floats.
    """
    b = x_nhwc.shape[0]
    assert x_nhwc.shape[1:] == (IMG_H, IMG_W, IMG_C)

    # Narrow-dtype activation stream: the kernel is HBM-bound on this operand.
    x_flat = x_nhwc.reshape(b, IN_DIM).astype(stream_dtype)
    w1p, b1p, w2p, b2p = _fold_and_pad_params(params)

    # Batch tile: >=32 sublanes (covers bf16 packing), shrink for tiny batches.
    # No wrapper-side padding: the last grid step is a partial block; Pallas drops
    # the out-of-range output rows at writeback, and garbage input rows only affect
    # their own (dropped) output rows.
    tb = max(32, min(tb, _round_up(b, 32)))
    grid = (pl.cdiv(b, tb),)

    out = pl.pallas_call(
        _mlp_kernel,
        out_shape=jax.ShapeDtypeStruct((b, CLS_PAD), jnp.float32),
        grid_spec=pltpu.PrefetchScalarGridSpec(
            num_scalar_prefetch=0,
            grid=grid,
            in_specs=[
                pl.BlockSpec((tb, IN_DIM), lambda i: (i, 0)),        # streamed x tile
                pl.BlockSpec((IN_DIM, HID_PAD), lambda i: (0, 0)),   # resident weights
                pl.BlockSpec((1, HID_PAD), lambda i: (0, 0)),
                pl.BlockSpec((HID_PAD, CLS_PAD), lambda i: (0, 0)),
                pl.BlockSpec((1, CLS_PAD), lambda i: (0, 0)),
            ],
            out_specs=pl.BlockSpec((tb, CLS_PAD), lambda i: (i, 0)),
        ),
        compiler_params=pltpu.CompilerParams(
            dimension_semantics=("parallel",),
            vmem_limit_bytes=48 << 20,
        ),
    )(x_flat, w1p, b1p, w2p, b2p)

    # TODO(synk): if the consumer tolerates 128-wide padded logits, return `out`
    # directly and skip this extra HBM slice pass over the output.
    return out[:, :CLASSES]


def init_params(key):
    """Deterministic init matching torch.nn.Linear default (U(-1/sqrt(fan_in), +))."""
    k1, k2, k3, k4 = jax.random.split(key, 4)
    bound1 = 1.0 / jnp.sqrt(jnp.float32(IN_DIM))
    bound2 = 1.0 / jnp.sqrt(jnp.float32(HIDDEN))
    # Stored as (in, out) so the kernel does x @ W directly (== x @ torch_W.T).
    w1 = jax.random.uniform(k1, (IN_DIM, HIDDEN), jnp.float32, -bound1, bound1)
    b1 = jax.random.uniform(k2, (HIDDEN,), jnp.float32, -bound1, bound1)
    w2 = jax.random.uniform(k3, (HIDDEN, CLASSES), jnp.float32, -bound2, bound2)
    b2 = jax.random.uniform(k4, (CLASSES,), jnp.float32, -bound2, bound2)
    return w1, b1, w2, b2


def reference_forward(x_nhwc, params):
    """Pure-JAX f32 reference of the PyTorch forward (unfolded normalization)."""
    w1, b1, w2, b2 = params
    x = x_nhwc.astype(jnp.float32) / 255.0
    x = (x - jnp.asarray(CIFAR_MEAN, jnp.float32)) / jnp.asarray(CIFAR_STD, jnp.float32)
    x = x.reshape(x.shape[0], -1)
    h = jnp.maximum(x @ w1 + b1, 0.0)
    return h @ w2 + b2


if __name__ == "__main__":
    key = jax.random.PRNGKey(0)
    kx, kp = jax.random.split(key)

    batch = 2
    # Integer pixel values in [0, 255] (real CIFAR data); exactly representable in
    # the bf16 activation stream, so the kernel matches the f32 reference.
    x = jax.random.randint(kx, (batch, IMG_H, IMG_W, IMG_C), 0, 256).astype(jnp.float32)
    params = init_params(kp)

    out = jax.block_until_ready(cifar100_mlp_forward(x, params))

    ref = reference_forward(x, params)
    assert out.shape == (batch, CLASSES)
    assert jnp.allclose(out, ref, atol=1e-3, rtol=1e-3), "mismatch vs JAX reference"

    print("KERNEL_OK")
</pallas_src>

<mosaic_0001>
module attributes {stable_mosaic.version = 11 : i64} {
  func.func @_mlp_kernel(%arg0: i32, %arg1: memref<32x3072xbf16, #tpu.memory_space<vmem>>, %arg2: memref<3072x128xf32, #tpu.memory_space<vmem>>, %arg3: memref<1x128xf32, #tpu.memory_space<vmem>>, %arg4: memref<128x128xf32, #tpu.memory_space<vmem>>, %arg5: memref<1x128xf32, #tpu.memory_space<vmem>>, %arg6: memref<32x128xf32, #tpu.memory_space<vmem>>) attributes {dimension_semantics = [#tpu.dimension_semantics<parallel>], iteration_bounds = array<i64: 1>, scalar_prefetch = 0 : i64, scratch_operands = 0 : i64, tpu.core_type = #tpu.core_type<tc>, window_params = [{transform_indices = @transform_0, window_bounds = array<i64: 32, 3072>}, {pipeline_mode = #tpu.pipeline_mode<synchronous>, transform_indices = @transform_1, window_bounds = array<i64: 3072, 128>}, {pipeline_mode = #tpu.pipeline_mode<synchronous>, transform_indices = @transform_2, window_bounds = array<i64: 1, 128>}, {pipeline_mode = #tpu.pipeline_mode<synchronous>, transform_indices = @transform_3, window_bounds = array<i64: 128, 128>}, {pipeline_mode = #tpu.pipeline_mode<synchronous>, transform_indices = @transform_4, window_bounds = array<i64: 1, 128>}, {transform_indices = @transform_5, window_bounds = array<i64: 32, 128>}]} {
    %c0 = arith.constant 0 : index
    %c0_0 = arith.constant 0 : index
    %0 = vector.load %arg1[%c0, %c0_0] : memref<32x3072xbf16, #tpu.memory_space<vmem>>, vector<32x3072xbf16>
    %1 = arith.extf %0 : vector<32x3072xbf16> to vector<32x3072xf32>
    %c0_1 = arith.constant 0 : index
    %c0_2 = arith.constant 0 : index
    %2 = vector.load %arg2[%c0_1, %c0_2] : memref<3072x128xf32, #tpu.memory_space<vmem>>, vector<3072x128xf32>
    %cst = arith.constant dense<0.000000e+00> : vector<32x128xf32>
    %3 = tpu.matmul %1, %2, %cst {dimension_numbers = #tpu.dot_dimension_numbers<[1], [0], [0], [1], [0, 0, 1, 1], [], []>} : vector<32x3072xf32>, vector<3072x128xf32>, vector<32x128xf32> -> vector<32x128xf32>
    %c0_3 = arith.constant 0 : index
    %c0_4 = arith.constant 0 : index
    %4 = vector.load %arg3[%c0_3, %c0_4] : memref<1x128xf32, #tpu.memory_space<vmem>>, vector<1x128xf32>
    %5 = vector.broadcast %4 : vector<1x128xf32> to vector<32x128xf32>
    %6 = arith.addf %3, %5 : vector<32x128xf32>
    %cst_5 = arith.constant 0.000000e+00 : f32
    %7 = vector.broadcast %cst_5 : f32 to vector<32x128xf32>
    %8 = arith.maximumf %6, %7 : vector<32x128xf32>
    %c0_6 = arith.constant 0 : index
    %c0_7 = arith.constant 0 : index
    %9 = vector.load %arg4[%c0_6, %c0_7] : memref<128x128xf32, #tpu.memory_space<vmem>>, vector<128x128xf32>
    %cst_8 = arith.constant dense<0.000000e+00> : vector<32x128xf32>
    %10 = tpu.matmul %8, %9, %cst_8 {dimension_numbers = #tpu.dot_dimension_numbers<[1], [0], [0], [1], [0, 0, 1, 1], [], []>} : vector<32x128xf32>, vector<128x128xf32>, vector<32x128xf32> -> vector<32x128xf32>
    %c0_9 = arith.constant 0 : index
    %c0_10 = arith.constant 0 : index
    %11 = vector.load %arg5[%c0_9, %c0_10] : memref<1x128xf32, #tpu.memory_space<vmem>>, vector<1x128xf32>
    %12 = vector.broadcast %11 : vector<1x128xf32> to vector<32x128xf32>
    %13 = arith.addf %10, %12 : vector<32x128xf32>
    %c0_11 = arith.constant 0 : index
    %c0_12 = arith.constant 0 : index
    %14 = vector.load %arg6[%c0_11, %c0_12] : memref<32x128xf32, #tpu.memory_space<vmem>>, vector<32x128xf32>
    tpu.vector_store %arg6[%c0_11, %c0_12], %13 {strides = array<i32>} : memref<32x128xf32, #tpu.memory_space<vmem>>, vector<32x128xf32>,
    return
  }
  func.func @transform_0(%arg0: i32) -> (i32, i32) {
    %c0_i32 = arith.constant 0 : i32
    %c0_i32_0 = arith.constant 0 : i32
    return %arg0, %c0_i32 : i32, i32
  }
  func.func @transform_1(%arg0: i32) -> (i32, i32) {
    %c0_i32 = arith.constant 0 : i32
    %c0_i32_0 = arith.constant 0 : i32
    %c0_i32_1 = arith.constant 0 : i32
    return %c0_i32, %c0_i32_0 : i32, i32
  }
  func.func @transform_2(%arg0: i32) -> (i32, i32) {
    %c0_i32 = arith.constant 0 : i32
    %c0_i32_0 = arith.constant 0 : i32
    %c0_i32_1 = arith.constant 0 : i32
    return %c0_i32, %c0_i32_0 : i32, i32
  }
  func.func @transform_3(%arg0: i32) -> (i32, i32) {
    %c0_i32 = arith.constant 0 : i32
    %c0_i32_0 = arith.constant 0 : i32
    %c0_i32_1 = arith.constant 0 : i32
    return %c0_i32, %c0_i32_0 : i32, i32
  }
  func.func @transform_4(%arg0: i32) -> (i32, i32) {
    %c0_i32 = arith.constant 0 : i32
    %c0_i32_0 = arith.constant 0 : i32
    %c0_i32_1 = arith.constant 0 : i32
    return %c0_i32, %c0_i32_0 : i32, i32
  }
  func.func @transform_5(%arg0: i32) -> (i32, i32) {
    %c0_i32 = arith.constant 0 : i32
    %c0_i32_0 = arith.constant 0 : i32
    return %arg0, %c0_i32 : i32, i32
  }
}

</mosaic_0001>

<llo_original>
// kernel: tpu_custom_call.1
$region0: #{tpu_custom_call.1}
  #allocation0 [shape = 'u32[]', space=smem, size = 0x4, offset = 0x4, fixed_abs, tag = 'smem constant byte address 0x4 - core index']
  #allocation1 [shape = 'u32[144,128]{1,0:T(1,128)}', space=vmem, size = 0x12000, scoped, tag = 'internal scratch']
  %s0 = inlined_call_operand.hbm [shape: bf16[2,3072], index: 0, kind: input, shape index: {}]
  %s1 = inlined_call_operand.hbm [shape: f32[3072,128], index: 1, kind: input, shape index: {}]
  %s2 = inlined_call_operand.hbm [shape: f32[1,128], index: 2, kind: input, shape index: {}]
  %s3 = inlined_call_operand.hbm [shape: f32[128,128], index: 3, kind: input, shape index: {}]
  %s4 = inlined_call_operand.hbm [shape: f32[1,128], index: 4, kind: input, shape index: {}]
  %s5 = inlined_call_operand.hbm [shape: f32[2,128], index: 5, kind: output, shape index: {}]
  %s6 = sld [smem:[#allocation0]]
  $region50: #{tpu_custom_call.1} parent=0
    _
  %s8 = ssub.s32 1, %s6
  %s9 = scalar_select 0, %s8, %s6
  $region1: #{tpu_custom_call.1} parent=0
    #allocation2 [shape = 'u8[196608]{0}', space=vmem, size = 0x30000, scoped, tag = 'input window, operand 0, single buffered']
    #allocation3 [shape = 's32[1]{0}', space=sflag, size = 0x4, scoped, tag = 'scoped memory for tpu_custom_call.1']
    #allocation4 [shape = 's32[1]{0}', space=sflag, size = 0x4, scoped, tag = 'scoped memory for tpu_custom_call.1']
    #allocation5 [shape = 'u8[1572864]{0}', space=vmem, size = 0x180000, scoped, tag = 'input window, operand 1, single buffered']
    #allocation6 [shape = 's32[1]{0}', space=sflag, size = 0x4, scoped, tag = 'scoped memory for tpu_custom_call.1']
    #allocation7 [shape = 'u8[512]{0}', space=vmem, size = 0x400, scoped, tag = 'input window, operand 2, single buffered']
    #allocation8 [shape = 'u8[65536]{0}', space=vmem, size = 0x10000, scoped, tag = 'input window, operand 3, single buffered']
    #allocation9 [shape = 's32[1]{0}', space=sflag, size = 0x4, scoped, tag = 'scoped memory for tpu_custom_call.1']
    #allocation10 [shape = 'u8[512]{0}', space=vmem, size = 0x400, scoped, tag = 'input window, operand 4, single buffered']
    #allocation11 [shape = 'u8[16384]{0}', space=vmem, size = 0x4000, scoped, tag = 'output window, operand 0, single buffered']
    %10 = vsyncpa [#allocation3], 0
    %11 = vsyncpa [#allocation6], 0
    %12 = vsyncpa [#allocation9], 0
    %13 = vsyncpa [#allocation4], 0
    // Predicated region
    $region2: #{tpu_custom_call.1} parent=1 // pred_check
      _
    $region3: #{tpu_custom_call.1} parent=1 // pred_check_branch
      %15 = sbr.rel (0) target = $region5
    $region4: #{tpu_custom_call.1} parent=1 // pred_region
      %s17 = ssub.s32 6144, 384
      %18 = vsyncadd [#allocation3], %s17
      %s19 = sshll.u32 [#allocation2], 4
      %s20 = int_to_ptr.vmem [resolvable:$true] %s19
      %25 = dma.hbm_to_vmem [thread:$0]  %s0, 384, %s20, [#allocation3], 384, 384, 24
    $region5: #{tpu_custom_call.1} parent=1 // pred_fallthru
      _
    // Predicated region
    $region6: #{tpu_custom_call.1} parent=1 // pred_check
      _
    $region7: #{tpu_custom_call.1} parent=1 // pred_check_branch
      %27 = sbr.rel (0) target = $region9
    $region8: #{tpu_custom_call.1} parent=1 // pred_region
      %s29 = ssub.s32 49152, 49152
      %30 = vsyncadd [#allocation6], %s29
      %s31 = sshll.u32 [#allocation5], 4
      %s32 = int_to_ptr.vmem [resolvable:$true] %s31
      %37 = dma.hbm_to_vmem [thread:$0]  %s1, 49152, %s32, [#allocation6], 128, 128, 8
    $region9: #{tpu_custom_call.1} parent=1 // pred_fallthru
      _
    // Predicated region
    $region10: #{tpu_custom_call.1} parent=1 // pred_check
      _
    $region11: #{tpu_custom_call.1} parent=1 // pred_check_branch
      %39 = sbr.rel (0) target = $region13
    $region12: #{tpu_custom_call.1} parent=1 // pred_region
      %s41 = ssub.s32 16, 16
      %42 = vsyncadd [#allocation6], %s41
      %s44 = sshll.u32 [#allocation7], 4
      %s45 = int_to_ptr.vmem [resolvable:$true] %s44
      %47 = dma.hbm_to_vmem [thread:$0]  %s2, 16, %s45, [#allocation6]
    $region13: #{tpu_custom_call.1} parent=1 // pred_fallthru
      _
    // Predicated region
    $region14: #{tpu_custom_call.1} parent=1 // pred_check
      _
    $region15: #{tpu_custom_call.1} parent=1 // pred_check_branch
      %49 = sbr.rel (0) target = $region17
    $region16: #{tpu_custom_call.1} parent=1 // pred_region
      %s51 = ssub.s32 2048, 2048
      %52 = vsyncadd [#allocation9], %s51
      %s53 = sshll.u32 [#allocation8], 4
      %s54 = int_to_ptr.vmem [resolvable:$true] %s53
      %59 = dma.hbm_to_vmem [thread:$0]  %s3, 2048, %s54, [#allocation9], 128, 128, 8
    $region17: #{tpu_custom_call.1} parent=1 // pred_fallthru
      _
    // Predicated region
    $region18: #{tpu_custom_call.1} parent=1 // pred_check
      _
    $region19: #{tpu_custom_call.1} parent=1 // pred_check_branch
      %61 = sbr.rel (0) target = $region21
    $region20: #{tpu_custom_call.1} parent=1 // pred_region
      %s63 = ssub.s32 16, 16
      %64 = vsyncadd [#allocation9], %s63
      %s66 = sshll.u32 [#allocation10], 4
      %s67 = int_to_ptr.vmem [resolvable:$true] %s66
      %69 = dma.hbm_to_vmem [thread:$0]  %s4, 16, %s67, [#allocation9]
    $region21: #{tpu_custom_call.1} parent=1 // pred_fallthru
      _
    // Predicated region
    $region22: #{tpu_custom_call.1} parent=1 // pred_check
      _
    $region23: #{tpu_custom_call.1} parent=1 // pred_check_branch
      %71 = sbr.rel (0) target = $region25
    $region24: #{tpu_custom_call.1} parent=1 // pred_region
      %72 = dma.done [#allocation3], 6144
    $region25: #{tpu_custom_call.1} parent=1 // pred_fallthru
      _
    // Predicated region
    $region26: #{tpu_custom_call.1} parent=1 // pred_check
      _
    $region27: #{tpu_custom_call.1} parent=1 // pred_check_branch
      %74 = sbr.rel (0) target = $region29
    $region28: #{tpu_custom_call.1} parent=1 // pred_region
      %75 = dma.done [#allocation6], 49152
    $region29: #{tpu_custom_call.1} parent=1 // pred_fallthru
      _
    // Predicated region
    $region30: #{tpu_custom_call.1} parent=1 // pred_check
      _
    $region31: #{tpu_custom_call.1} parent=1 // pred_check_branch
      %77 = sbr.rel (0) target = $region33
    $region32: #{tpu_custom_call.1} parent=1 // pred_region
      %78 = dma.done [#allocation6], 16
    $region33: #{tpu_custom_call.1} parent=1 // pred_fallthru
      _
    // Predicated region
    $region34: #{tpu_custom_call.1} parent=1 // pred_check
      _
    $region35: #{tpu_custom_call.1} parent=1 // pred_check_branch
      %80 = sbr.rel (0) target = $region37
    $region36: #{tpu_custom_call.1} parent=1 // pred_region
      %81 = dma.done [#allocation9], 2048
    $region37: #{tpu_custom_call.1} parent=1 // pred_fallthru
      _
    // Predicated region
    $region38: #{tpu_custom_call.1} parent=1 // pred_check
      _
    $region39: #{tpu_custom_call.1} parent=1 // pred_check_branch
      %83 = sbr.rel (0) target = $region41
    $region40: #{tpu_custom_call.1} parent=1 // pred_region
      %84 = dma.done [#allocation9], 16
    $region41: #{tpu_custom_call.1} parent=1 // pred_fallthru
      _
    %v85 = vld [vmem:[#allocation2] sm:$0xff]
    %v86 = vld [vmem:[#allocation2 + $0x8] sm:$0xff]
    %v87 = vld [vmem:[#allocation2 + $0x10] sm:$0xff]
    %v88 = vld [vmem:[#allocation2 + $0x18] sm:$0xff]
    %v89 = vld [vmem:[#allocation2 + $0x20] sm:$0xff]
    %v90 = vld [vmem:[#allocation2 + $0x28] sm:$0xff]
    %v91 = vld [vmem:[#allocation2 + $0x30] sm:$0xff]
    %v92 = vld [vmem:[#allocation2 + $0x38] sm:$0xff]
    %v93 = vld [vmem:[#allocation2 + $0x40] sm:$0xff]
    %v94 = vld [vmem:[#allocation2 + $0x48] sm:$0xff]
    %v95 = vld [vmem:[#allocation2 + $0x50] sm:$0xff]
    %v96 = vld [vmem:[#allocation2 + $0x58] sm:$0xff]
    %v97 = vld [vmem:[#allocation2 + $0x60] sm:$0xff]
    %v98 = vld [vmem:[#allocation2 + $0x68] sm:$0xff]
    %v99 = vld [vmem:[#allocation2 + $0x70] sm:$0xff]
    %v100 = vld [vmem:[#allocation2 + $0x78] sm:$0xff]
    %v101 = vld [vmem:[#allocation2 + $0x80] sm:$0xff]
    %v102 = vld [vmem:[#allocation2 + $0x88] sm:$0xff]
    %v103 = vld [vmem:[#allocation2 + $0x90] sm:$0xff]
    %v104 = vld [vmem:[#allocation2 + $0x98] sm:$0xff]
    %v105 = vld [vmem:[#allocation2 + $0xa0] sm:$0xff]
    %v106 = vld [vmem:[#allocation2 + $0xa8] sm:$0xff]
    %v107 = vld [vmem:[#allocation2 + $0xb0] sm:$0xff]
    %v108 = vld [vmem:[#allocation2 + $0xb8] sm:$0xff]
    %v109 = vld [vmem:[#allocation2 + $0xc0] sm:$0xff]
    %v110 = vld [vmem:[#allocation2 + $0xc8] sm:$0xff]
    %v111 = vld [vmem:[#allocation2 + $0xd0] sm:$0xff]
    %v112 = vld [vmem:[#allocation2 + $0xd8] sm:$0xff]
    %v113 = vld [vmem:[#allocation2 + $0xe0] sm:$0xff]
    %v114 = vld [vmem:[#allocation2 + $0xe8] sm:$0xff]
    %v115 = vld [vmem:[#allocation2 + $0xf0] sm:$0xff]
    %v116 = vld [vmem:[#allocation2 + $0xf8] sm:$0xff]
    %v117 = vld [vmem:[#allocation2 + $0x100] sm:$0xff]
    %v118 = vld [vmem:[#allocation2 + $0x108] sm:$0xff]
    %v119 = vld [vmem:[#allocation2 + $0x110] sm:$0xff]
    %v120 = vld [vmem:[#allocation2 + $0x118] sm:$0xff]
    %v121 = vld [vmem:[#allocation2 + $0x120] sm:$0xff]
    %v122 = vld [vmem:[#allocation2 + $0x128] sm:$0xff]
    %v123 = vld [vmem:[#allocation2 + $0x130] sm:$0xff]
    %v124 = vld [vmem:[#allocation2 + $0x138] sm:$0xff]
    %v125 = vld [vmem:[#allocation2 + $0x140] sm:$0xff]
    %v126 = vld [vmem:[#allocation2 + $0x148] sm:$0xff]
    %v127 = vld [vmem:[#allocation2 + $0x150] sm:$0xff]
    %v128 = vld [vmem:[#allocation2 + $0x158] sm:$0xff]
    %v129 = vld [vmem:[#allocation2 + $0x160] sm:$0xff]
    %v130 = vld [vmem:[#allocation2 + $0x168] sm:$0xff]
    %v131 = vld [vmem:[#allocation2 + $0x170] sm:$0xff]
    %v132 = vld [vmem:[#allocation2 + $0x178] sm:$0xff]
    %v133 = vunpack.c.l.bf16 %v85
    %v134 = vunpack.c.h.bf16 %v85
    %v135 = vunpack.c.l.bf16 %v86
    %v136 = vunpack.c.h.bf16 %v86
    %v137 = vunpack.c.l.bf16 %v87
    %v138 = vunpack.c.h.bf16 %v87
    %v139 = vunpack.c.l.bf16 %v88
    %v140 = vunpack.c.h.bf16 %v88
    %v141 = vunpack.c.l.bf16 %v89
    %v142 = vunpack.c.h.bf16 %v89
    %v143 = vunpack.c.l.bf16 %v90
    %v144 = vunpack.c.h.bf16 %v90
    %v145 = vunpack.c.l.bf16 %v91
    %v146 = vunpack.c.h.bf16 %v91
    %v147 = vunpack.c.l.bf16 %v92
    %v148 = vunpack.c.h.bf16 %v92
    %v149 = vunpack.c.l.bf16 %v93
    %v150 = vunpack.c.h.bf16 %v93
    %v151 = vunpack.c.l.bf16 %v94
    %v152 = vunpack.c.h.bf16 %v94
    %v153 = vunpack.c.l.bf16 %v95
    %v154 = vunpack.c.h.bf16 %v95
    %v155 = vunpack.c.l.bf16 %v96
    %v156 = vunpack.c.h.bf16 %v96
    %v157 = vunpack.c.l.bf16 %v97
    %v158 = vunpack.c.h.bf16 %v97
    %v159 = vunpack.c.l.bf16 %v98
    %v160 = vunpack.c.h.bf16 %v98
    %v161 = vunpack.c.l.bf16 %v99
    %v162 = vunpack.c.h.bf16 %v99
    %v163 = vunpack.c.l.bf16 %v100
    %v164 = vunpack.c.h.bf16 %v100
    %v165 = vunpack.c.l.bf16 %v101
    %v166 = vunpack.c.h.bf16 %v101
    %v167 = vunpack.c.l.bf16 %v102
    %v168 = vunpack.c.h.bf16 %v102
    %v169 = vunpack.c.l.bf16 %v103
    %v170 = vunpack.c.h.bf16 %v103
    %v171 = vunpack.c.l.bf16 %v104
    %v172 = vunpack.c.h.bf16 %v104
    %v173 = vunpack.c.l.bf16 %v105
    %v174 = vunpack.c.h.bf16 %v105
    %v175 = vunpack.c.l.bf16 %v106
    %v176 = vunpack.c.h.bf16 %v106
    %v177 = vunpack.c.l.bf16 %v107
    %v178 = vunpack.c.h.bf16 %v107
    %v179 = vunpack.c.l.bf16 %v108
    %v180 = vunpack.c.h.bf16 %v108
    %v181 = vunpack.c.l.bf16 %v109
    %v182 = vunpack.c.h.bf16 %v109
    %v183 = vunpack.c.l.bf16 %v110
    %v184 = vunpack.c.h.bf16 %v110
    %v185 = vunpack.c.l.bf16 %v111
    %v186 = vunpack.c.h.bf16 %v111
    %v187 = vunpack.c.l.bf16 %v112
    %v188 = vunpack.c.h.bf16 %v112
    %v189 = vunpack.c.l.bf16 %v113
    %v190 = vunpack.c.h.bf16 %v113
    %v191 = vunpack.c.l.bf16 %v114
    %v192 = vunpack.c.h.bf16 %v114
    %v193 = vunpack.c.l.bf16 %v115
    %v194 = vunpack.c.h.bf16 %v115
    %v195 = vunpack.c.l.bf16 %v116
    %v196 = vunpack.c.h.bf16 %v116
    %v197 = vunpack.c.l.bf16 %v117
    %v198 = vunpack.c.h.bf16 %v117
    %v199 = vunpack.c.l.bf16 %v118
    %v200 = vunpack.c.h.bf16 %v118
    %v201 = vunpack.c.l.bf16 %v119
    %v202 = vunpack.c.h.bf16 %v119
    %v203 = vunpack.c.l.bf16 %v120
    %v204 = vunpack.c.h.bf16 %v120
    %v205 = vunpack.c.l.bf16 %v121
    %v206 = vunpack.c.h.bf16 %v121
    %v207 = vunpack.c.l.bf16 %v122
    %v208 = vunpack.c.h.bf16 %v122
    %v209 = vunpack.c.l.bf16 %v123
    %v210 = vunpack.c.h.bf16 %v123
    %v211 = vunpack.c.l.bf16 %v124
    %v212 = vunpack.c.h.bf16 %v124
    %v213 = vunpack.c.l.bf16 %v125
    %v214 = vunpack.c.h.bf16 %v125
    %v215 = vunpack.c.l.bf16 %v126
    %v216 = vunpack.c.h.bf16 %v126
    %v217 = vunpack.c.l.bf16 %v127
    %v218 = vunpack.c.h.bf16 %v127
    %v219 = vunpack.c.l.bf16 %v128
    %v220 = vunpack.c.h.bf16 %v128
    %v221 = vunpack.c.l.bf16 %v129
    %v222 = vunpack.c.h.bf16 %v129
    %v223 = vunpack.c.l.bf16 %v130
    %v224 = vunpack.c.h.bf16 %v130
    %v225 = vunpack.c.l.bf16 %v131
    %v226 = vunpack.c.h.bf16 %v131
    %v227 = vunpack.c.l.bf16 %v132
    %v228 = vunpack.c.h.bf16 %v132
    %v229 = vld [vmem:[#allocation5] sm:$0xff]
    %v230 = vld [vmem:[#allocation5 + $0x8] sm:$0xff]
    %v231 = vld [vmem:[#allocation5 + $0x10] sm:$0xff]
    %v232 = vld [vmem:[#allocation5 + $0x18] sm:$0xff]
    %v233 = vld [vmem:[#allocation5 + $0x20] sm:$0xff]
    %v234 = vld [vmem:[#allocation5 + $0x28] sm:$0xff]
    %v235 = vld [vmem:[#allocation5 + $0x30] sm:$0xff]
    %v236 = vld [vmem:[#allocation5 + $0x38] sm:$0xff]
    %v237 = vld [vmem:[#allocation5 + $0x40] sm:$0xff]
    %v238 = vld [vmem:[#allocation5 + $0x48] sm:$0xff]
    %v239 = vld [vmem:[#allocation5 + $0x50] sm:$0xff]
    %v240 = vld [vmem:[#allocation5 + $0x58] sm:$0xff]
    %v241 = vld [vmem:[#allocation5 + $0x60] sm:$0xff]
    %v242 = vld [vmem:[#allocation5 + $0x68] sm:$0xff]
    %v243 = vld [vmem:[#allocation5 + $0x70] sm:$0xff]
    %v244 = vld [vmem:[#allocation5 + $0x78] sm:$0xff]
    %v245 = vld [vmem:[#allocation5 + $0x80] sm:$0xff]
    %v246 = vld [vmem:[#allocation5 + $0x88] sm:$0xff]
    %v247 = vld [vmem:[#allocation5 + $0x90] sm:$0xff]
    %v248 = vld [vmem:[#allocation5 + $0x98] sm:$0xff]
    %v249 = vld [vmem:[#allocation5 + $0xa0] sm:$0xff]
    %v250 = vld [vmem:[#allocation5 + $0xa8] sm:$0xff]
    %v251 = vld [vmem:[#allocation5 + $0xb0] sm:$0xff]
    %v252 = vld [vmem:[#allocation5 + $0xb8] sm:$0xff]
    %v253 = vld [vmem:[#allocation5 + $0xc0] sm:$0xff]
    %v254 = vld [vmem:[#allocation5 + $0xc8] sm:$0xff]
    %v255 = vld [vmem:[#allocation5 + $0xd0] sm:$0xff]
    %v256 = vld [vmem:[#allocation5 + $0xd8] sm:$0xff]
    %v257 = vld [vmem:[#allocation5 + $0xe0] sm:$0xff]
    %v258 = vld [vmem:[#allocation5 + $0xe8] sm:$0xff]
    %v259 = vld [vmem:[#allocation5 + $0xf0] sm:$0xff]
    %v260 = vld [vmem:[#allocation5 + $0xf8] sm:$0xff]
    %v261 = vld [vmem:[#allocation5 + $0x100] sm:$0xff]
    %v262 = vld [vmem:[#allocation5 + $0x108] sm:$0xff]
    %v263 = vld [vmem:[#allocation5 + $0x110] sm:$0xff]
    %v264 = vld [vmem:[#allocation5 + $0x118] sm:$0xff]
    %v265 = vld [vmem:[#allocation5 + $0x120] sm:$0xff]
    %v266 = vld [vmem:[#allocation5 + $0x128] sm:$0xff]
    %v267 = vld [vmem:[#allocation5 + $0x130] sm:$0xff]
    %v268 = vld [vmem:[#allocation5 + $0x138] sm:$0xff]
    %v269 = vld [vmem:[#allocation5 + $0x140] sm:$0xff]
    %v270 = vld [vmem:[#allocation5 + $0x148] sm:$0xff]
    %v271 = vld [vmem:[#allocation5 + $0x150] sm:$0xff]
    %v272 = vld [vmem:[#allocation5 + $0x158] sm:$0xff]
    %v273 = vld [vmem:[#allocation5 + $0x160] sm:$0xff]
    %v274 = vld [vmem:[#allocation5 + $0x168] sm:$0xff]
    %v275 = vld [vmem:[#allocation5 + $0x170] sm:$0xff]
    %v276 = vld [vmem:[#allocation5 + $0x178] sm:$0xff]
    %v277 = vld [vmem:[#allocation5 + $0x180] sm:$0xff]
    %v278 = vld [vmem:[#allocation5 + $0x188] sm:$0xff]
    %v279 = vld [vmem:[#allocation5 + $0x190] sm:$0xff]
    %v280 = vld [vmem:[#allocation5 + $0x198] sm:$0xff]
    %v281 = vld [vmem:[#allocation5 + $0x1a0] sm:$0xff]
    %v282 = vld [vmem:[#allocation5 + $0x1a8] sm:$0xff]
    %v283 = vld [vmem:[#allocation5 + $0x1b0] sm:$0xff]
    %v284 = vld [vmem:[#allocation5 + $0x1b8] sm:$0xff]
    %v285 = vld [vmem:[#allocation5 + $0x1c0] sm:$0xff]
    %v286 = vld [vmem:[#allocation5 + $0x1c8] sm:$0xff]
    %v287 = vld [vmem:[#allocation5 + $0x1d0] sm:$0xff]
    %v288 = vld [vmem:[#allocation5 + $0x1d8] sm:$0xff]
    %v289 = vld [vmem:[#allocation5 + $0x1e0] sm:$0xff]
    %v290 = vld [vmem:[#allocation5 + $0x1e8] sm:$0xff]
    %v291 = vld [vmem:[#allocation5 + $0x1f0] sm:$0xff]
    %v292 = vld [vmem:[#allocation5 + $0x1f8] sm:$0xff]
    %v293 = vld [vmem:[#allocation5 + $0x200] sm:$0xff]
    %v294 = vld [vmem:[#allocation5 + $0x208] sm:$0xff]
    %v295 = vld [vmem:[#allocation5 + $0x210] sm:$0xff]
    %v296 = vld [vmem:[#allocation5 + $0x218] sm:$0xff]
    %v297 = vld [vmem:[#allocation5 + $0x220] sm:$0xff]
    %v298 = vld [vmem:[#allocation5 + $0x228] sm:$0xff]
    %v299 = vld [vmem:[#allocation5 + $0x230] sm:$0xff]
    %v300 = vld [vmem:[#allocation5 + $0x238] sm:$0xff]
    %v301 = vld [vmem:[#allocation5 + $0x240] sm:$0xff]
    %v302 = vld [vmem:[#allocation5 + $0x248] sm:$0xff]
    %v303 = vld [vmem:[#allocation5 + $0x250] sm:$0xff]
    %v304 = vld [vmem:[#allocation5 + $0x258] sm:$0xff]
    %v305 = vld [vmem:[#allocation5 + $0x260] sm:$0xff]
    %v306 = vld [vmem:[#allocation5 + $0x268] sm:$0xff]
    %v307 = vld [vmem:[#allocation5 + $0x270] sm:$0xff]
    %v308 = vld [vmem:[#allocation5 + $0x278] sm:$0xff]
    %v309 = vld [vmem:[#allocation5 + $0x280] sm:$0xff]
    %v310 = vld [vmem:[#allocation5 + $0x288] sm:$0xff]
    %v311 = vld [vmem:[#allocation5 + $0x290] sm:$0xff]
    %v312 = vld [vmem:[#allocation5 + $0x298] sm:$0xff]
    %v313 = vld [vmem:[#allocation5 + $0x2a0] sm:$0xff]
    %v314 = vld [vmem:[#allocation5 + $0x2a8] sm:$0xff]
    %v315 = vld [vmem:[#allocation5 + $0x2b0] sm:$0xff]
    %v316 = vld [vmem:[#allocation5 + $0x2b8] sm:$0xff]
    %v317 = vld [vmem:[#allocation5 + $0x2c0] sm:$0xff]
    %v318 = vld [vmem:[#allocation5 + $0x2c8] sm:$0xff]
    %v319 = vld [vmem:[#allocation5 + $0x2d0] sm:$0xff]
    %v320 = vld [vmem:[#allocation5 + $0x2d8] sm:$0xff]
    %v321 = vld [vmem:[#allocation5 + $0x2e0] sm:$0xff]
    %v322 = vld [vmem:[#allocation5 + $0x2e8] sm:$0xff]
    %v323 = vld [vmem:[#allocation5 + $0x2f0] sm:$0xff]
    %v324 = vld [vmem:[#allocation5 + $0x2f8] sm:$0xff]
    %v325 = vld [vmem:[#allocation5 + $0x300] sm:$0xff]
    %v326 = vld [vmem:[#allocation5 + $0x308] sm:$0xff]
    %v327 = vld [vmem:[#allocation5 + $0x310] sm:$0xff]
    %v328 = vld [vmem:[#allocation5 + $0x318] sm:$0xff]
    %v329 = vld [vmem:[#allocation5 + $0x320] sm:$0xff]
    %v330 = vld [vmem:[#allocation5 + $0x328] sm:$0xff]
    %v331 = vld [vmem:[#allocation5 + $0x330] sm:$0xff]
    %v332 = vld [vmem:[#allocation5 + $0x338] sm:$0xff]
    %v333 = vld [vmem:[#allocation5 + $0x340] sm:$0xff]
    %v334 = vld [vmem:[#allocation5 + $0x348] sm:$0xff]
    %v335 = vld [vmem:[#allocation5 + $0x350] sm:$0xff]
    %v336 = vld [vmem:[#allocation5 + $0x358] sm:$0xff]
    %v337 = vld [vmem:[#allocation5 + $0x360] sm:$0xff]
    %v338 = vld [vmem:[#allocation5 + $0x368] sm:$0xff]
    %v339 = vld [vmem:[#allocation5 + $0x370] sm:$0xff]
    %v340 = vld [vmem:[#allocation5 + $0x378] sm:$0xff]
    %v341 = vld [vmem:[#allocation5 + $0x380] sm:$0xff]
    %v342 = vld [vmem:[#allocation5 + $0x388] sm:$0xff]
    %v343 = vld [vmem:[#allocation5 + $0x390] sm:$0xff]
    %v344 = vld [vmem:[#allocation5 + $0x398] sm:$0xff]
    %v345 = vld [vmem:[#allocation5 + $0x3a0] sm:$0xff]
    %v346 = vld [vmem:[#allocation5 + $0x3a8] sm:$0xff]
    %v347 = vld [vmem:[#allocation5 + $0x3b0] sm:$0xff]
    %v348 = vld [vmem:[#allocation5 + $0x3b8] sm:$0xff]
    %v349 = vld [vmem:[#allocation5 + $0x3c0] sm:$0xff]
    %v350 = vld [vmem:[#allocation5 + $0x3c8] sm:$0xff]
    %v351 = vld [vmem:[#allocation5 + $0x3d0] sm:$0xff]
    %v352 = vld [vmem:[#allocation5 + $0x3d8] sm:$0xff]
    %v353 = vld [vmem:[#allocation5 + $0x3e0] sm:$0xff]
    %v354 = vld [vmem:[#allocation5 + $0x3e8] sm:$0xff]
    %v355 = vld [vmem:[#allocation5 + $0x3f0] sm:$0xff]
    %v356 = vld [vmem:[#allocation5 + $0x3f8] sm:$0xff]
    %v357 = vld [vmem:[#allocation5 + $0x400] sm:$0xff]
    %v358 = vld [vmem:[#allocation5 + $0x408] sm:$0xff]
    %v359 = vld [vmem:[#allocation5 + $0x410] sm:$0xff]
    %v360 = vld [vmem:[#allocation5 + $0x418] sm:$0xff]
    %v361 = vld [vmem:[#allocation5 + $0x420] sm:$0xff]
    %v362 = vld [vmem:[#allocation5 + $0x428] sm:$0xff]
    %v363 = vld [vmem:[#allocation5 + $0x430] sm:$0xff]
    %v364 = vld [vmem:[#allocation5 + $0x438] sm:$0xff]
    %v365 = vld [vmem:[#allocation5 + $0x440] sm:$0xff]
    %v366 = vld [vmem:[#allocation5 + $0x448] sm:$0xff]
    %v367 = vld [vmem:[#allocation5 + $0x450] sm:$0xff]
    %v368 = vld [vmem:[#allocation5 + $0x458] sm:$0xff]
    %v369 = vld [vmem:[#allocation5 + $0x460] sm:$0xff]
    %v370 = vld [vmem:[#allocation5 + $0x468] sm:$0xff]
    %v371 = vld [vmem:[#allocation5 + $0x470] sm:$0xff]
    %v372 = vld [vmem:[#allocation5 + $0x478] sm:$0xff]
    %v373 = vld [vmem:[#allocation5 + $0x480] sm:$0xff]
    %v374 = vld [vmem:[#allocation5 + $0x488] sm:$0xff]
    %v375 = vld [vmem:[#allocation5 + $0x490] sm:$0xff]
    %v376 = vld [vmem:[#allocation5 + $0x498] sm:$0xff]
    %v377 = vld [vmem:[#allocation5 + $0x4a0] sm:$0xff]
    %v378 = vld [vmem:[#allocation5 + $0x4a8] sm:$0xff]
    %v379 = vld [vmem:[#allocation5 + $0x4b0] sm:$0xff]
    %v380 = vld [vmem:[#allocation5 + $0x4b8] sm:$0xff]
    %v381 = vld [vmem:[#allocation5 + $0x4c0] sm:$0xff]
    %v382 = vld [vmem:[#allocation5 + $0x4c8] sm:$0xff]
    %v383 = vld [vmem:[#allocation5 + $0x4d0] sm:$0xff]
    %v384 = vld [vmem:[#allocation5 + $0x4d8] sm:$0xff]
    %v385 = vld [vmem:[#allocation5 + $0x4e0] sm:$0xff]
    %v386 = vld [vmem:[#allocation5 + $0x4e8] sm:$0xff]
    %v387 = vld [vmem:[#allocation5 + $0x4f0] sm:$0xff]
    %v388 = vld [vmem:[#allocation5 + $0x4f8] sm:$0xff]
    %v389 = vld [vmem:[#allocation5 + $0x500] sm:$0xff]
    %v390 = vld [vmem:[#allocation5 + $0x508] sm:$0xff]
    %v391 = vld [vmem:[#allocation5 + $0x510] sm:$0xff]
    %v392 = vld [vmem:[#allocation5 + $0x518] sm:$0xff]
    %v393 = vld [vmem:[#allocation5 + $0x520] sm:$0xff]
    %v394 = vld [vmem:[#allocation5 + $0x528] sm:$0xff]
    %v395 = vld [vmem:[#allocation5 + $0x530] sm:$0xff]
    %v396 = vld [vmem:[#allocation5 + $0x538] sm:$0xff]
    %v397 = vld [vmem:[#allocation5 + $0x540] sm:$0xff]
    %v398 = vld [vmem:[#allocation5 + $0x548] sm:$0xff]
    %v399 = vld [vmem:[#allocation5 + $0x550] sm:$0xff]
    %v400 = vld [vmem:[#allocation5 + $0x558] sm:$0xff]
    %v401 = vld [vmem:[#allocation5 + $0x560] sm:$0xff]
    %v402 = vld [vmem:[#allocation5 + $0x568] sm:$0xff]
    %v403 = vld [vmem:[#allocation5 + $0x570] sm:$0xff]
    %v404 = vld [vmem:[#allocation5 + $0x578] sm:$0xff]
    %v405 = vld [vmem:[#allocation5 + $0x580] sm:$0xff]
    %v406 = vld [vmem:[#allocation5 + $0x588] sm:$0xff]
    %v407 = vld [vmem:[#allocation5 + $0x590] sm:$0xff]
    %v408 = vld [vmem:[#allocation5 + $0x598] sm:$0xff]
    %v409 = vld [vmem:[#allocation5 + $0x5a0] sm:$0xff]
    %v410 = vld [vmem:[#allocation5 + $0x5a8] sm:$0xff]
    %v411 = vld [vmem:[#allocation5 + $0x5b0] sm:$0xff]
    %v412 = vld [vmem:[#allocation5 + $0x5b8] sm:$0xff]
    %v413 = vld [vmem:[#allocation5 + $0x5c0] sm:$0xff]
    %v414 = vld [vmem:[#allocation5 + $0x5c8] sm:$0xff]
    %v415 = vld [vmem:[#allocation5 + $0x5d0] sm:$0xff]
    %v416 = vld [vmem:[#allocation5 + $0x5d8] sm:$0xff]
    %v417 = vld [vmem:[#allocation5 + $0x5e0] sm:$0xff]
    %v418 = vld [vmem:[#allocation5 + $0x5e8] sm:$0xff]
    %v419 = vld [vmem:[#allocation5 + $0x5f0] sm:$0xff]
    %v420 = vld [vmem:[#allocation5 + $0x5f8] sm:$0xff]
    %v421 = vld [vmem:[#allocation5 + $0x600] sm:$0xff]
    %v422 = vld [vmem:[#allocation5 + $0x608] sm:$0xff]
    %v423 = vld [vmem:[#allocation5 + $0x610] sm:$0xff]
    %v424 = vld [vmem:[#allocation5 + $0x618] sm:$0xff]
    %v425 = vld [vmem:[#allocation5 + $0x620] sm:$0xff]
    %v426 = vld [vmem:[#allocation5 + $0x628] sm:$0xff]
    %v427 = vld [vmem:[#allocation5 + $0x630] sm:$0xff]
    %v428 = vld [vmem:[#allocation5 + $0x638] sm:$0xff]
    %v429 = vld [vmem:[#allocation5 + $0x640] sm:$0xff]
    %v430 = vld [vmem:[#allocation5 + $0x648] sm:$0xff]
    %v431 = vld [vmem:[#allocation5 + $0x650] sm:$0xff]
    %v432 = vld [vmem:[#allocation5 + $0x658] sm:$0xff]
    %v433 = vld [vmem:[#allocation5 + $0x660] sm:$0xff]
    %v434 = vld [vmem:[#allocation5 + $0x668] sm:$0xff]
    %v435 = vld [vmem:[#allocation5 + $0x670] sm:$0xff]
    %v436 = vld [vmem:[#allocation5 + $0x678] sm:$0xff]
    %v437 = vld [vmem:[#allocation5 + $0x680] sm:$0xff]
    %v438 = vld [vmem:[#allocation5 + $0x688] sm:$0xff]
    %v439 = vld [vmem:[#allocation5 + $0x690] sm:$0xff]
    %v440 = vld [vmem:[#allocation5 + $0x698] sm:$0xff]
    %v441 = vld [vmem:[#allocation5 + $0x6a0] sm:$0xff]
    %v442 = vld [vmem:[#allocation5 + $0x6a8] sm:$0xff]
    %v443 = vld [vmem:[#allocation5 + $0x6b0] sm:$0xff]
    %v444 = vld [vmem:[#allocation5 + $0x6b8] sm:$0xff]
    %v445 = vld [vmem:[#allocation5 + $0x6c0] sm:$0xff]
    %v446 = vld [vmem:[#allocation5 + $0x6c8] sm:$0xff]
    %v447 = vld [vmem:[#allocation5 + $0x6d0] sm:$0xff]
    %v448 = vld [vmem:[#allocation5 + $0x6d8] sm:$0xff]
    %v449 = vld [vmem:[#allocation5 + $0x6e0] sm:$0xff]
    %v450 = vld [vmem:[#allocation5 + $0x6e8] sm:$0xff]
    %v451 = vld [vmem:[#allocation5 + $0x6f0] sm:$0xff]
    %v452 = vld [vmem:[#allocation5 + $0x6f8] sm:$0xff]
    %v453 = vld [vmem:[#allocation5 + $0x700] sm:$0xff]
    %v454 = vld [vmem:[#allocation5 + $0x708] sm:$0xff]
    %v455 = vld [vmem:[#allocation5 + $0x710] sm:$0xff]
    %v456 = vld [vmem:[#allocation5 + $0x718] sm:$0xff]
    %v457 = vld [vmem:[#allocation5 + $0x720] sm:$0xff]
    %v458 = vld [vmem:[#allocation5 + $0x728] sm:$0xff]
    %v459 = vld [vmem:[#allocation5 + $0x730] sm:$0xff]
    %v460 = vld [vmem:[#allocation5 + $0x738] sm:$0xff]
    %v461 = vld [vmem:[#allocation5 + $0x740] sm:$0xff]
    %v462 = vld [vmem:[#allocation5 + $0x748] sm:$0xff]
    %v463 = vld [vmem:[#allocation5 + $0x750] sm:$0xff]
    %v464 = vld [vmem:[#allocation5 + $0x758] sm:$0xff]
    %v465 = vld [vmem:[#allocation5 + $0x760] sm:$0xff]
    %v466 = vld [vmem:[#allocation5 + $0x768] sm:$0xff]
    %v467 = vld [vmem:[#allocation5 + $0x770] sm:$0xff]
    %v468 = vld [vmem:[#allocation5 + $0x778] sm:$0xff]
    %v469 = vld [vmem:[#allocation5 + $0x780] sm:$0xff]
    %v470 = vld [vmem:[#allocation5 + $0x788] sm:$0xff]
    %v471 = vld [vmem:[#allocation5 + $0x790] sm:$0xff]
    %v472 = vld [vmem:[#allocation5 + $0x798] sm:$0xff]
    %v473 = vld [vmem:[#allocation5 + $0x7a0] sm:$0xff]
    %v474 = vld [vmem:[#allocation5 + $0x7a8] sm:$0xff]
    %v475 = vld [vmem:[#allocation5 + $0x7b0] sm:$0xff]
    %v476 = vld [vmem:[#allocation5 + $0x7b8] sm:$0xff]
    %v477 = vld [vmem:[#allocation5 + $0x7c0] sm:$0xff]
    %v478 = vld [vmem:[#allocation5 + $0x7c8] sm:$0xff]
    %v479 = vld [vmem:[#allocation5 + $0x7d0] sm:$0xff]
    %v480 = vld [vmem:[#allocation5 + $0x7d8] sm:$0xff]
    %v481 = vld [vmem:[#allocation5 + $0x7e0] sm:$0xff]
    %v482 = vld [vmem:[#allocation5 + $0x7e8] sm:$0xff]
    %v483 = vld [vmem:[#allocation5 + $0x7f0] sm:$0xff]
    %v484 = vld [vmem:[#allocation5 + $0x7f8] sm:$0xff]
    %v485 = vld [vmem:[#allocation5 + $0x800] sm:$0xff]
    %v486 = vld [vmem:[#allocation5 + $0x808] sm:$0xff]
    %v487 = vld [vmem:[#allocation5 + $0x810] sm:$0xff]
    %v488 = vld [vmem:[#allocation5 + $0x818] sm:$0xff]
    %v489 = vld [vmem:[#allocation5 + $0x820] sm:$0xff]
    %v490 = vld [vmem:[#allocation5 + $0x828] sm:$0xff]
    %v491 = vld [vmem:[#allocation5 + $0x830] sm:$0xff]
    %v492 = vld [vmem:[#allocation5 + $0x838] sm:$0xff]
    %v493 = vld [vmem:[#allocation5 + $0x840] sm:$0xff]
    %v494 = vld [vmem:[#allocation5 + $0x848] sm:$0xff]
    %v495 = vld [vmem:[#allocation5 + $0x850] sm:$0xff]
    %v496 = vld [vmem:[#allocation5 + $0x858] sm:$0xff]
    %v497 = vld [vmem:[#allocation5 + $0x860] sm:$0xff]
    %v498 = vld [vmem:[#allocation5 + $0x868] sm:$0xff]
    %v499 = vld [vmem:[#allocation5 + $0x870] sm:$0xff]
    %v500 = vld [vmem:[#allocation5 + $0x878] sm:$0xff]
    %v501 = vld [vmem:[#allocation5 + $0x880] sm:$0xff]
    %v502 = vld [vmem:[#allocation5 + $0x888] sm:$0xff]
    %v503 = vld [vmem:[#allocation5 + $0x890] sm:$0xff]
    %v504 = vld [vmem:[#allocation5 + $0x898] sm:$0xff]
    %v505 = vld [vmem:[#allocation5 + $0x8a0] sm:$0xff]
    %v506 = vld [vmem:[#allocation5 + $0x8a8] sm:$0xff]
    %v507 = vld [vmem:[#allocation5 + $0x8b0] sm:$0xff]
    %v508 = vld [vmem:[#allocation5 + $0x8b8] sm:$0xff]
    %v509 = vld [vmem:[#allocation5 + $0x8c0] sm:$0xff]
    %v510 = vld [vmem:[#allocation5 + $0x8c8] sm:$0xff]
    %v511 = vld [vmem:[#allocation5 + $0x8d0] sm:$0xff]
    %v512 = vld [vmem:[#allocation5 + $0x8d8] sm:$0xff]
    %v513 = vld [vmem:[#allocation5 + $0x8e0] sm:$0xff]
    %v514 = vld [vmem:[#allocation5 + $0x8e8] sm:$0xff]
    %v515 = vld [vmem:[#allocation5 + $0x8f0] sm:$0xff]
    %v516 = vld [vmem:[#allocation5 + $0x8f8] sm:$0xff]
    %v517 = vld [vmem:[#allocation5 + $0x900] sm:$0xff]
    %v518 = vld [vmem:[#allocation5 + $0x908] sm:$0xff]
    %v519 = vld [vmem:[#allocation5 + $0x910] sm:$0xff]
    %v520 = vld [vmem:[#allocation5 + $0x918] sm:$0xff]
    %v521 = vld [vmem:[#allocation5 + $0x920] sm:$0xff]
    %v522 = vld [vmem:[#allocation5 + $0x928] sm:$0xff]
    %v523 = vld [vmem:[#allocation5 + $0x930] sm:$0xff]
    %v524 = vld [vmem:[#allocation5 + $0x938] sm:$0xff]
    %v525 = vld [vmem:[#allocation5 + $0x940] sm:$0xff]
    %v526 = vld [vmem:[#allocation5 + $0x948] sm:$0xff]
    %v527 = vld [vmem:[#allocation5 + $0x950] sm:$0xff]
    %v528 = vld [vmem:[#allocation5 + $0x958] sm:$0xff]
    %v529 = vld [vmem:[#allocation5 + $0x960] sm:$0xff]
    %v530 = vld [vmem:[#allocation5 + $0x968] sm:$0xff]
    %v531 = vld [vmem:[#allocation5 + $0x970] sm:$0xff]
    %v532 = vld [vmem:[#allocation5 + $0x978] sm:$0xff]
    %v533 = vld [vmem:[#allocation5 + $0x980] sm:$0xff]
    %v534 = vld [vmem:[#allocation5 + $0x988] sm:$0xff]
    %v535 = vld [vmem:[#allocation5 + $0x990] sm:$0xff]
    %v536 = vld [vmem:[#allocation5 + $0x998] sm:$0xff]
    %v537 = vld [vmem:[#allocation5 + $0x9a0] sm:$0xff]
    %v538 = vld [vmem:[#allocation5 + $0x9a8] sm:$0xff]
    %v539 = vld [vmem:[#allocation5 + $0x9b0] sm:$0xff]
    %v540 = vld [vmem:[#allocation5 + $0x9b8] sm:$0xff]
    %v541 = vld [vmem:[#allocation5 + $0x9c0] sm:$0xff]
    %v542 = vld [vmem:[#allocation5 + $0x9c8] sm:$0xff]
    %v543 = vld [vmem:[#allocation5 + $0x9d0] sm:$0xff]
    %v544 = vld [vmem:[#allocation5 + $0x9d8] sm:$0xff]
    %v545 = vld [vmem:[#allocation5 + $0x9e0] sm:$0xff]
    %v546 = vld [vmem:[#allocation5 + $0x9e8] sm:$0xff]
    %v547 = vld [vmem:[#allocation5 + $0x9f0] sm:$0xff]
    %v548 = vld [vmem:[#allocation5 + $0x9f8] sm:$0xff]
    %v549 = vld [vmem:[#allocation5 + $0xa00] sm:$0xff]
    %v550 = vld [vmem:[#allocation5 + $0xa08] sm:$0xff]
    %v551 = vld [vmem:[#allocation5 + $0xa10] sm:$0xff]
    %v552 = vld [vmem:[#allocation5 + $0xa18] sm:$0xff]
    %v553 = vld [vmem:[#allocation5 + $0xa20] sm:$0xff]
    %v554 = vld [vmem:[#allocation5 + $0xa28] sm:$0xff]
    %v555 = vld [vmem:[#allocation5 + $0xa30] sm:$0xff]
    %v556 = vld [vmem:[#allocation5 + $0xa38] sm:$0xff]
    %v557 = vld [vmem:[#allocation5 + $0xa40] sm:$0xff]
    %v558 = vld [vmem:[#allocation5 + $0xa48] sm:$0xff]
    %v559 = vld [vmem:[#allocation5 + $0xa50] sm:$0xff]
    %v560 = vld [vmem:[#allocation5 + $0xa58] sm:$0xff]
    %v561 = vld [vmem:[#allocation5 + $0xa60] sm:$0xff]
    %v562 = vld [vmem:[#allocation5 + $0xa68] sm:$0xff]
    %v563 = vld [vmem:[#allocation5 + $0xa70] sm:$0xff]
    %v564 = vld [vmem:[#allocation5 + $0xa78] sm:$0xff]
    %v565 = vld [vmem:[#allocation5 + $0xa80] sm:$0xff]
    %v566 = vld [vmem:[#allocation5 + $0xa88] sm:$0xff]
    %v567 = vld [vmem:[#allocation5 + $0xa90] sm:$0xff]
    %v568 = vld [vmem:[#allocation5 + $0xa98] sm:$0xff]
    %v569 = vld [vmem:[#allocation5 + $0xaa0] sm:$0xff]
    %v570 = vld [vmem:[#allocation5 + $0xaa8] sm:$0xff]
    %v571 = vld [vmem:[#allocation5 + $0xab0] sm:$0xff]
    %v572 = vld [vmem:[#allocation5 + $0xab8] sm:$0xff]
    %v573 = vld [vmem:[#allocation5 + $0xac0] sm:$0xff]
    %v574 = vld [vmem:[#allocation5 + $0xac8] sm:$0xff]
    %v575 = vld [vmem:[#allocation5 + $0xad0] sm:$0xff]
    %v576 = vld [vmem:[#allocation5 + $0xad8] sm:$0xff]
    %v577 = vld [vmem:[#allocation5 + $0xae0] sm:$0xff]
    %v578 = vld [vmem:[#allocation5 + $0xae8] sm:$0xff]
    %v579 = vld [vmem:[#allocation5 + $0xaf0] sm:$0xff]
    %v580 = vld [vmem:[#allocation5 + $0xaf8] sm:$0xff]
    %v581 = vld [vmem:[#allocation5 + $0xb00] sm:$0xff]
    %v582 = vld [vmem:[#allocation5 + $0xb08] sm:$0xff]
    %v583 = vld [vmem:[#allocation5 + $0xb10] sm:$0xff]
    %v584 = vld [vmem:[#allocation5 + $0xb18] sm:$0xff]
    %v585 = vld [vmem:[#allocation5 + $0xb20] sm:$0xff]
    %v586 = vld [vmem:[#allocation5 + $0xb28] sm:$0xff]
    %v587 = vld [vmem:[#allocation5 + $0xb30] sm:$0xff]
    %v588 = vld [vmem:[#allocation5 + $0xb38] sm:$0xff]
    %v589 = vld [vmem:[#allocation5 + $0xb40] sm:$0xff]
    %v590 = vld [vmem:[#allocation5 + $0xb48] sm:$0xff]
    %v591 = vld [vmem:[#allocation5 + $0xb50] sm:$0xff]
    %v592 = vld [vmem:[#allocation5 + $0xb58] sm:$0xff]
    %v593 = vld [vmem:[#allocation5 + $0xb60] sm:$0xff]
    %v594 = vld [vmem:[#allocation5 + $0xb68] sm:$0xff]
    %v595 = vld [vmem:[#allocation5 + $0xb70] sm:$0xff]
    %v596 = vld [vmem:[#allocation5 + $0xb78] sm:$0xff]
    %v597 = vld [vmem:[#allocation5 + $0xb80] sm:$0xff]
    %v598 = vld [vmem:[#allocation5 + $0xb88] sm:$0xff]
    %v599 = vld [vmem:[#allocation5 + $0xb90] sm:$0xff]
    %v600 = vld [vmem:[#allocation5 + $0xb98] sm:$0xff]
    %v601 = vld [vmem:[#allocation5 + $0xba0] sm:$0xff]
    %v602 = vld [vmem:[#allocation5 + $0xba8] sm:$0xff]
    %v603 = vld [vmem:[#allocation5 + $0xbb0] sm:$0xff]
    %v604 = vld [vmem:[#allocation5 + $0xbb8] sm:$0xff]
    %v605 = vld [vmem:[#allocation5 + $0xbc0] sm:$0xff]
    %v606 = vld [vmem:[#allocation5 + $0xbc8] sm:$0xff]
    %v607 = vld [vmem:[#allocation5 + $0xbd0] sm:$0xff]
    %v608 = vld [vmem:[#allocation5 + $0xbd8] sm:$0xff]
    %v609 = vld [vmem:[#allocation5 + $0xbe0] sm:$0xff]
    %v610 = vld [vmem:[#allocation5 + $0xbe8] sm:$0xff]
    %v611 = vld [vmem:[#allocation5 + $0xbf0] sm:$0xff]
    %v612 = vld [vmem:[#allocation5 + $0xbf8] sm:$0xff]
    %v613 = vld [vmem:[#allocation7] sm:$0x1]
    %v615 = vlaneseq
    %v616 = vshrl.u32 %v615, 7
    %v617 = vsub.s32 0, %v616
    %v618 = vrot.slane %v613, %v617
    %v716 = vcombine.low %v133, %v139
    %v717 = vcombine.high %v133, %v139
    %v718 = vcombine.low %v145, %v151
    %v719 = vcombine.high %v145, %v151
    %v721 = vunpack.c.l.s4 1983009808
    %v722 = vunpack.c.0.s8 %v721
    %v723 = vlaneseq
    %v724 = vshrl.u32 %v723, 7
    %v725 = vsub.s32 %v722, %v724
    %v726 = vrot.slane %v716, %v725
    %v728 = vunpack.c.l.s4 1983009808
    %v729 = vunpack.c.0.s8 %v728
    %v730 = vlaneseq
    %v731 = vshrl.u32 %v730, 7
    %v732 = vsub.s32 %v729, %v731
    %v733 = vrot.slane %v717, %v732
    %v735 = vunpack.c.l.s4 1983009808
    %v736 = vunpack.c.0.s8 %v735
    %v737 = vlaneseq
    %v738 = vshrl.u32 %v737, 7
    %v739 = vsub.s32 %v736, %v738
    %v740 = vrot.slane %v718, %v739
    %v742 = vunpack.c.l.s4 1983009808
    %v743 = vunpack.c.0.s8 %v742
    %v744 = vlaneseq
    %v745 = vshrl.u32 %v744, 7
    %v746 = vsub.s32 %v743, %v745
    %v747 = vrot.slane %v719, %v746
    %v748 = vcombine.low %v726, %v740
    %v749 = vcombine.high %v726, %v740
    %v750 = vcombine.low %v733, %v747
    %v751 = vcombine.high %v733, %v747
    %v752 = vcombine.low %v134, %v140
    %v753 = vcombine.high %v134, %v140
    %v754 = vcombine.low %v146, %v152
    %v755 = vcombine.high %v146, %v152
    %v757 = vunpack.c.l.s4 1983009808
    %v758 = vunpack.c.0.s8 %v757
    %v759 = vlaneseq
    %v760 = vshrl.u32 %v759, 7
    %v761 = vsub.s32 %v758, %v760
    %v762 = vrot.slane %v752, %v761
    %v764 = vunpack.c.l.s4 1983009808
    %v765 = vunpack.c.0.s8 %v764
    %v766 = vlaneseq
    %v767 = vshrl.u32 %v766, 7
    %v768 = vsub.s32 %v765, %v767
    %v769 = vrot.slane %v753, %v768
    %v771 = vunpack.c.l.s4 1983009808
    %v772 = vunpack.c.0.s8 %v771
    %v773 = vlaneseq
    %v774 = vshrl.u32 %v773, 7
    %v775 = vsub.s32 %v772, %v774
    %v776 = vrot.slane %v754, %v775
    %v778 = vunpack.c.l.s4 1983009808
    %v779 = vunpack.c.0.s8 %v778
    %v780 = vlaneseq
    %v781 = vshrl.u32 %v780, 7
    %v782 = vsub.s32 %v779, %v781
    %v783 = vrot.slane %v755, %v782
    %v784 = vcombine.low %v762, %v776
    %v785 = vcombine.high %v762, %v776
    %v786 = vcombine.low %v769, %v783
    %v787 = vcombine.high %v769, %v783
    %v788 = vcombine.low %v135, %v141
    %v789 = vcombine.high %v135, %v141
    %v790 = vcombine.low %v147, %v153
    %v791 = vcombine.high %v147, %v153
    %v793 = vunpack.c.l.s4 1983009808
    %v794 = vunpack.c.0.s8 %v793
    %v795 = vlaneseq
    %v796 = vshrl.u32 %v795, 7
    %v797 = vsub.s32 %v794, %v796
    %v798 = vrot.slane %v788, %v797
    %v800 = vunpack.c.l.s4 1983009808
    %v801 = vunpack.c.0.s8 %v800
    %v802 = vlaneseq
    %v803 = vshrl.u32 %v802, 7
    %v804 = vsub.s32 %v801, %v803
    %v805 = vrot.slane %v789, %v804
    %v807 = vunpack.c.l.s4 1983009808
    %v808 = vunpack.c.0.s8 %v807
    %v809 = vlaneseq
    %v810 = vshrl.u32 %v809, 7
    %v811 = vsub.s32 %v808, %v810
    %v812 = vrot.slane %v790, %v811
    %v814 = vunpack.c.l.s4 1983009808
    %v815 = vunpack.c.0.s8 %v814
    %v816 = vlaneseq
    %v817 = vshrl.u32 %v816, 7
    %v818 = vsub.s32 %v815, %v817
    %v819 = vrot.slane %v791, %v818
    %v820 = vcombine.low %v798, %v812
    %v821 = vcombine.high %v798, %v812
    %v822 = vcombine.low %v805, %v819
    %v823 = vcombine.high %v805, %v819
    %v824 = vcombine.low %v136, %v142
    %v825 = vcombine.high %v136, %v142
    %v826 = vcombine.low %v148, %v154
    %v827 = vcombine.high %v148, %v154
    %v829 = vunpack.c.l.s4 1983009808
    %v830 = vunpack.c.0.s8 %v829
    %v831 = vlaneseq
    %v832 = vshrl.u32 %v831, 7
    %v833 = vsub.s32 %v830, %v832
    %v834 = vrot.slane %v824, %v833
    %v836 = vunpack.c.l.s4 1983009808
    %v837 = vunpack.c.0.s8 %v836
    %v838 = vlaneseq
    %v839 = vshrl.u32 %v838, 7
    %v840 = vsub.s32 %v837, %v839
    %v841 = vrot.slane %v825, %v840
    %v843 = vunpack.c.l.s4 1983009808
    %v844 = vunpack.c.0.s8 %v843
    %v845 = vlaneseq
    %v846 = vshrl.u32 %v845, 7
    %v847 = vsub.s32 %v844, %v846
    %v848 = vrot.slane %v826, %v847
    %v850 = vunpack.c.l.s4 1983009808
    %v851 = vunpack.c.0.s8 %v850
    %v852 = vlaneseq
    %v853 = vshrl.u32 %v852, 7
    %v854 = vsub.s32 %v851, %v853
    %v855 = vrot.slane %v827, %v854
    %v856 = vcombine.low %v834, %v848
    %v857 = vcombine.high %v834, %v848
    %v858 = vcombine.low %v841, %v855
    %v859 = vcombine.high %v841, %v855
    %v860 = vcombine.low %v137, %v143
    %v861 = vcombine.high %v137, %v143
    %v862 = vcombine.low %v149, %v155
    %v863 = vcombine.high %v149, %v155
    %v865 = vunpack.c.l.s4 1983009808
    %v866 = vunpack.c.0.s8 %v865
    %v867 = vlaneseq
    %v868 = vshrl.u32 %v867, 7
    %v869 = vsub.s32 %v866, %v868
    %v870 = vrot.slane %v860, %v869
    %v872 = vunpack.c.l.s4 1983009808
    %v873 = vunpack.c.0.s8 %v872
    %v874 = vlaneseq
    %v875 = vshrl.u32 %v874, 7
    %v876 = vsub.s32 %v873, %v875
    %v877 = vrot.slane %v861, %v876
    %v879 = vunpack.c.l.s4 1983009808
    %v880 = vunpack.c.0.s8 %v879
    %v881 = vlaneseq
    %v882 = vshrl.u32 %v881, 7
    %v883 = vsub.s32 %v880, %v882
    %v884 = vrot.slane %v862, %v883
    %v886 = vunpack.c.l.s4 1983009808
    %v887 = vunpack.c.0.s8 %v886
    %v888 = vlaneseq
    %v889 = vshrl.u32 %v888, 7
    %v890 = vsub.s32 %v887, %v889
    %v891 = vrot.slane %v863, %v890
    %v892 = vcombine.low %v870, %v884
    %v893 = vcombine.high %v870, %v884
    %v894 = vcombine.low %v877, %v891
    %v895 = vcombine.high %v877, %v891
    %v896 = vcombine.low %v138, %v144
    %v897 = vcombine.high %v138, %v144
    %v898 = vcombine.low %v150, %v156
    %v899 = vcombine.high %v150, %v156
    %v901 = vunpack.c.l.s4 1983009808
    %v902 = vunpack.c.0.s8 %v901
    %v903 = vlaneseq
    %v904 = vshrl.u32 %v903, 7
    %v905 = vsub.s32 %v902, %v904
    %v906 = vrot.slane %v896, %v905
    %v908 = vunpack.c.l.s4 1983009808
    %v909 = vunpack.c.0.s8 %v908
    %v910 = vlaneseq
    %v911 = vshrl.u32 %v910, 7
    %v912 = vsub.s32 %v909, %v911
    %v913 = vrot.slane %v897, %v912
    %v915 = vunpack.c.l.s4 1983009808
    %v916 = vunpack.c.0.s8 %v915
    %v917 = vlaneseq
    %v918 = vshrl.u32 %v917, 7
    %v919 = vsub.s32 %v916, %v918
    %v920 = vrot.slane %v898, %v919
    %v922 = vunpack.c.l.s4 1983009808
    %v923 = vunpack.c.0.s8 %v922
    %v924 = vlaneseq
    %v925 = vshrl.u32 %v924, 7
    %v926 = vsub.s32 %v923, %v925
    %v927 = vrot.slane %v899, %v926
    %v928 = vcombine.low %v906, %v920
    %v929 = vcombine.high %v906, %v920
    %v930 = vcombine.low %v913, %v927
    %v931 = vcombine.high %v913, %v927
    %v932 = vcombine.low %v157, %v163
    %v933 = vcombine.high %v157, %v163
    %v934 = vcombine.low %v169, %v175
    %v935 = vcombine.high %v169, %v175
    %v937 = vunpack.c.l.s4 1983009808
    %v938 = vunpack.c.0.s8 %v937
    %v939 = vlaneseq
    %v940 = vshrl.u32 %v939, 7
    %v941 = vsub.s32 %v938, %v940
    %v942 = vrot.slane %v932, %v941
    %v944 = vunpack.c.l.s4 1983009808
    %v945 = vunpack.c.0.s8 %v944
    %v946 = vlaneseq
    %v947 = vshrl.u32 %v946, 7
    %v948 = vsub.s32 %v945, %v947
    %v949 = vrot.slane %v933, %v948
    %v951 = vunpack.c.l.s4 1983009808
    %v952 = vunpack.c.0.s8 %v951
    %v953 = vlaneseq
    %v954 = vshrl.u32 %v953, 7
    %v955 = vsub.s32 %v952, %v954
    %v956 = vrot.slane %v934, %v955
    %v958 = vunpack.c.l.s4 1983009808
    %v959 = vunpack.c.0.s8 %v958
    %v960 = vlaneseq
    %v961 = vshrl.u32 %v960, 7
    %v962 = vsub.s32 %v959, %v961
    %v963 = vrot.slane %v935, %v962
    %v964 = vcombine.low %v942, %v956
    %v965 = vcombine.high %v942, %v956
    %v966 = vcombine.low %v949, %v963
    %v967 = vcombine.high %v949, %v963
    %v968 = vcombine.low %v158, %v164
    %v969 = vcombine.high %v158, %v164
    %v970 = vcombine.low %v170, %v176
    %v971 = vcombine.high %v170, %v176
    %v973 = vunpack.c.l.s4 1983009808
    %v974 = vunpack.c.0.s8 %v973
    %v975 = vlaneseq
    %v976 = vshrl.u32 %v975, 7
    %v977 = vsub.s32 %v974, %v976
    %v978 = vrot.slane %v968, %v977
    %v980 = vunpack.c.l.s4 1983009808
    %v981 = vunpack.c.0.s8 %v980
    %v982 = vlaneseq
    %v983 = vshrl.u32 %v982, 7
    %v984 = vsub.s32 %v981, %v983
    %v985 = vrot.slane %v969, %v984
    %v987 = vunpack.c.l.s4 1983009808
    %v988 = vunpack.c.0.s8 %v987
    %v989 = vlaneseq
    %v990 = vshrl.u32 %v989, 7
    %v991 = vsub.s32 %v988, %v990
    %v992 = vrot.slane %v970, %v991
    %v994 = vunpack.c.l.s4 1983009808
    %v995 = vunpack.c.0.s8 %v994
    %v996 = vlaneseq
    %v997 = vshrl.u32 %v996, 7
    %v998 = vsub.s32 %v995, %v997
    %v999 = vrot.slane %v971, %v998
    %v1000 = vcombine.low %v978, %v992
    %v1001 = vcombine.high %v978, %v992
    %v1002 = vcombine.low %v985, %v999
    %v1003 = vcombine.high %v985, %v999
    %v1004 = vcombine.low %v159, %v165
    %v1005 = vcombine.high %v159, %v165
    %v1006 = vcombine.low %v171, %v177
    %v1007 = vcombine.high %v171, %v177
    %v1009 = vunpack.c.l.s4 1983009808
    %v1010 = vunpack.c.0.s8 %v1009
    %v1011 = vlaneseq
    %v1012 = vshrl.u32 %v1011, 7
    %v1013 = vsub.s32 %v1010, %v1012
    %v1014 = vrot.slane %v1004, %v1013
    %v1016 = vunpack.c.l.s4 1983009808
    %v1017 = vunpack.c.0.s8 %v1016
    %v1018 = vlaneseq
    %v1019 = vshrl.u32 %v1018, 7
    %v1020 = vsub.s32 %v1017, %v1019
    %v1021 = vrot.slane %v1005, %v1020
    %v1023 = vunpack.c.l.s4 1983009808
    %v1024 = vunpack.c.0.s8 %v1023
    %v1025 = vlaneseq
    %v1026 = vshrl.u32 %v1025, 7
    %v1027 = vsub.s32 %v1024, %v1026
    %v1028 = vrot.slane %v1006, %v1027
    %v1030 = vunpack.c.l.s4 1983009808
    %v1031 = vunpack.c.0.s8 %v1030
    %v1032 = vlaneseq
    %v1033 = vshrl.u32 %v1032, 7
    %v1034 = vsub.s32 %v1031, %v1033
    %v1035 = vrot.slane %v1007, %v1034
    %v1036 = vcombine.low %v1014, %v1028
    %v1037 = vcombine.high %v1014, %v1028
    %v1038 = vcombine.low %v1021, %v1035
    %v1039 = vcombine.high %v1021, %v1035
    %v1040 = vcombine.low %v160, %v166
    %v1041 = vcombine.high %v160, %v166
    %v1042 = vcombine.low %v172, %v178
    %v1043 = vcombine.high %v172, %v178
    %v1045 = vunpack.c.l.s4 1983009808
    %v1046 = vunpack.c.0.s8 %v1045
    %v1047 = vlaneseq
    %v1048 = vshrl.u32 %v1047, 7
    %v1049 = vsub.s32 %v1046, %v1048
    %v1050 = vrot.slane %v1040, %v1049
    %v1052 = vunpack.c.l.s4 1983009808
    %v1053 = vunpack.c.0.s8 %v1052
    %v1054 = vlaneseq
    %v1055 = vshrl.u32 %v1054, 7
    %v1056 = vsub.s32 %v1053, %v1055
    %v1057 = vrot.slane %v1041, %v1056
    %v1059 = vunpack.c.l.s4 1983009808
    %v1060 = vunpack.c.0.s8 %v1059
    %v1061 = vlaneseq
    %v1062 = vshrl.u32 %v1061, 7
    %v1063 = vsub.s32 %v1060, %v1062
    %v1064 = vrot.slane %v1042, %v1063
    %v1066 = vunpack.c.l.s4 1983009808
    %v1067 = vunpack.c.0.s8 %v1066
    %v1068 = vlaneseq
    %v1069 = vshrl.u32 %v1068, 7
    %v1070 = vsub.s32 %v1067, %v1069
    %v1071 = vrot.slane %v1043, %v1070
    %v1072 = vcombine.low %v1050, %v1064
    %v1073 = vcombine.high %v1050, %v1064
    %v1074 = vcombine.low %v1057, %v1071
    %v1075 = vcombine.high %v1057, %v1071
    %v1076 = vcombine.low %v161, %v167
    %v1077 = vcombine.high %v161, %v167
    %v1078 = vcombine.low %v173, %v179
    %v1079 = vcombine.high %v173, %v179
    %v1081 = vunpack.c.l.s4 1983009808
    %v1082 = vunpack.c.0.s8 %v1081
    %v1083 = vlaneseq
    %v1084 = vshrl.u32 %v1083, 7
    %v1085 = vsub.s32 %v1082, %v1084
    %v1086 = vrot.slane %v1076, %v1085
    %v1088 = vunpack.c.l.s4 1983009808
    %v1089 = vunpack.c.0.s8 %v1088
    %v1090 = vlaneseq
    %v1091 = vshrl.u32 %v1090, 7
    %v1092 = vsub.s32 %v1089, %v1091
    %v1093 = vrot.slane %v1077, %v1092
    %v1095 = vunpack.c.l.s4 1983009808
    %v1096 = vunpack.c.0.s8 %v1095
    %v1097 = vlaneseq
    %v1098 = vshrl.u32 %v1097, 7
    %v1099 = vsub.s32 %v1096, %v1098
    %v1100 = vrot.slane %v1078, %v1099
    %v1102 = vunpack.c.l.s4 1983009808
    %v1103 = vunpack.c.0.s8 %v1102
    %v1104 = vlaneseq
    %v1105 = vshrl.u32 %v1104, 7
    %v1106 = vsub.s32 %v1103, %v1105
    %v1107 = vrot.slane %v1079, %v1106
    %v1108 = vcombine.low %v1086, %v1100
    %v1109 = vcombine.high %v1086, %v1100
    %v1110 = vcombine.low %v1093, %v1107
    %v1111 = vcombine.high %v1093, %v1107
    %v1112 = vcombine.low %v162, %v168
    %v1113 = vcombine.high %v162, %v168
    %v1114 = vcombine.low %v174, %v180
    %v1115 = vcombine.high %v174, %v180
    %v1117 = vunpack.c.l.s4 1983009808
    %v1118 = vunpack.c.0.s8 %v1117
    %v1119 = vlaneseq
    %v1120 = vshrl.u32 %v1119, 7
    %v1121 = vsub.s32 %v1118, %v1120
    %v1122 = vrot.slane %v1112, %v1121
    %v1124 = vunpack.c.l.s4 1983009808
    %v1125 = vunpack.c.0.s8 %v1124
    %v1126 = vlaneseq
    %v1127 = vshrl.u32 %v1126, 7
    %v1128 = vsub.s32 %v1125, %v1127
    %v1129 = vrot.slane %v1113, %v1128
    %v1131 = vunpack.c.l.s4 1983009808
    %v1132 = vunpack.c.0.s8 %v1131
    %v1133 = vlaneseq
    %v1134 = vshrl.u32 %v1133, 7
    %v1135 = vsub.s32 %v1132, %v1134
    %v1136 = vrot.slane %v1114, %v1135
    %v1138 = vunpack.c.l.s4 1983009808
    %v1139 = vunpack.c.0.s8 %v1138
    %v1140 = vlaneseq
    %v1141 = vshrl.u32 %v1140, 7
    %v1142 = vsub.s32 %v1139, %v1141
    %v1143 = vrot.slane %v1115, %v1142
    %v1144 = vcombine.low %v1122, %v1136
    %v1145 = vcombine.high %v1122, %v1136
    %v1146 = vcombine.low %v1129, %v1143
    %v1147 = vcombine.high %v1129, %v1143
    %v1148 = vcombine.low %v181, %v187
    %v1149 = vcombine.high %v181, %v187
    %v1150 = vcombine.low %v193, %v199
    %v1151 = vcombine.high %v193, %v199
    %v1153 = vunpack.c.l.s4 1983009808
    %v1154 = vunpack.c.0.s8 %v1153
    %v1155 = vlaneseq
    %v1156 = vshrl.u32 %v1155, 7
    %v1157 = vsub.s32 %v1154, %v1156
    %v1158 = vrot.slane %v1148, %v1157
    %v1160 = vunpack.c.l.s4 1983009808
    %v1161 = vunpack.c.0.s8 %v1160
    %v1162 = vlaneseq
    %v1163 = vshrl.u32 %v1162, 7
    %v1164 = vsub.s32 %v1161, %v1163
    %v1165 = vrot.slane %v1149, %v1164
    %v1167 = vunpack.c.l.s4 1983009808
    %v1168 = vunpack.c.0.s8 %v1167
    %v1169 = vlaneseq
    %v1170 = vshrl.u32 %v1169, 7
    %v1171 = vsub.s32 %v1168, %v1170
    %v1172 = vrot.slane %v1150, %v1171
    %v1174 = vunpack.c.l.s4 1983009808
    %v1175 = vunpack.c.0.s8 %v1174
    %v1176 = vlaneseq
    %v1177 = vshrl.u32 %v1176, 7
    %v1178 = vsub.s32 %v1175, %v1177
    %v1179 = vrot.slane %v1151, %v1178
    %v1180 = vcombine.low %v1158, %v1172
    %v1181 = vcombine.high %v1158, %v1172
    %v1182 = vcombine.low %v1165, %v1179
    %v1183 = vcombine.high %v1165, %v1179
    %v1184 = vcombine.low %v182, %v188
    %v1185 = vcombine.high %v182, %v188
    %v1186 = vcombine.low %v194, %v200
    %v1187 = vcombine.high %v194, %v200
    %v1189 = vunpack.c.l.s4 1983009808
    %v1190 = vunpack.c.0.s8 %v1189
    %v1191 = vlaneseq
    %v1192 = vshrl.u32 %v1191, 7
    %v1193 = vsub.s32 %v1190, %v1192
    %v1194 = vrot.slane %v1184, %v1193
    %v1196 = vunpack.c.l.s4 1983009808
    %v1197 = vunpack.c.0.s8 %v1196
    %v1198 = vlaneseq
    %v1199 = vshrl.u32 %v1198, 7
    %v1200 = vsub.s32 %v1197, %v1199
    %v1201 = vrot.slane %v1185, %v1200
    %v1203 = vunpack.c.l.s4 1983009808
    %v1204 = vunpack.c.0.s8 %v1203
    %v1205 = vlaneseq
    %v1206 = vshrl.u32 %v1205, 7
    %v1207 = vsub.s32 %v1204, %v1206
    %v1208 = vrot.slane %v1186, %v1207
    %v1210 = vunpack.c.l.s4 1983009808
    %v1211 = vunpack.c.0.s8 %v1210
    %v1212 = vlaneseq
    %v1213 = vshrl.u32 %v1212, 7
    %v1214 = vsub.s32 %v1211, %v1213
    %v1215 = vrot.slane %v1187, %v1214
    %v1216 = vcombine.low %v1194, %v1208
    %v1217 = vcombine.high %v1194, %v1208
    %v1218 = vcombine.low %v1201, %v1215
    %v1219 = vcombine.high %v1201, %v1215
    %v1220 = vcombine.low %v183, %v189
    %v1221 = vcombine.high %v183, %v189
    %v1222 = vcombine.low %v195, %v201
    %v1223 = vcombine.high %v195, %v201
    %v1225 = vunpack.c.l.s4 1983009808
    %v1226 = vunpack.c.0.s8 %v1225
    %v1227 = vlaneseq
    %v1228 = vshrl.u32 %v1227, 7
    %v1229 = vsub.s32 %v1226, %v1228
    %v1230 = vrot.slane %v1220, %v1229
    %v1232 = vunpack.c.l.s4 1983009808
    %v1233 = vunpack.c.0.s8 %v1232
    %v1234 = vlaneseq
    %v1235 = vshrl.u32 %v1234, 7
    %v1236 = vsub.s32 %v1233, %v1235
    %v1237 = vrot.slane %v1221, %v1236
    %v1239 = vunpack.c.l.s4 1983009808
    %v1240 = vunpack.c.0.s8 %v1239
    %v1241 = vlaneseq
    %v1242 = vshrl.u32 %v1241, 7
    %v1243 = vsub.s32 %v1240, %v1242
    %v1244 = vrot.slane %v1222, %v1243
    %v1246 = vunpack.c.l.s4 1983009808
    %v1247 = vunpack.c.0.s8 %v1246
    %v1248 = vlaneseq
    %v1249 = vshrl.u32 %v1248, 7
    %v1250 = vsub.s32 %v1247, %v1249
    %v1251 = vrot.slane %v1223, %v1250
    %v1252 = vcombine.low %v1230, %v1244
    %v1253 = vcombine.high %v1230, %v1244
    %v1254 = vcombine.low %v1237, %v1251
    %v1255 = vcombine.high %v1237, %v1251
    %v1256 = vcombine.low %v184, %v190
    %v1257 = vcombine.high %v184, %v190
    %v1258 = vcombine.low %v196, %v202
    %v1259 = vcombine.high %v196, %v202
    %v1261 = vunpack.c.l.s4 1983009808
    %v1262 = vunpack.c.0.s8 %v1261
    %v1263 = vlaneseq
    %v1264 = vshrl.u32 %v1263, 7
    %v1265 = vsub.s32 %v1262, %v1264
    %v1266 = vrot.slane %v1256, %v1265
    %v1268 = vunpack.c.l.s4 1983009808
    %v1269 = vunpack.c.0.s8 %v1268
    %v1270 = vlaneseq
    %v1271 = vshrl.u32 %v1270, 7
    %v1272 = vsub.s32 %v1269, %v1271
    %v1273 = vrot.slane %v1257, %v1272
    %v1275 = vunpack.c.l.s4 1983009808
    %v1276 = vunpack.c.0.s8 %v1275
    %v1277 = vlaneseq
    %v1278 = vshrl.u32 %v1277, 7
    %v1279 = vsub.s32 %v1276, %v1278
    %v1280 = vrot.slane %v1258, %v1279
    %v1282 = vunpack.c.l.s4 1983009808
    %v1283 = vunpack.c.0.s8 %v1282
    %v1284 = vlaneseq
    %v1285 = vshrl.u32 %v1284, 7
    %v1286 = vsub.s32 %v1283, %v1285
    %v1287 = vrot.slane %v1259, %v1286
    %v1288 = vcombine.low %v1266, %v1280
    %v1289 = vcombine.high %v1266, %v1280
    %v1290 = vcombine.low %v1273, %v1287
    %v1291 = vcombine.high %v1273, %v1287
    %v1292 = vcombine.low %v185, %v191
    %v1293 = vcombine.high %v185, %v191
    %v1294 = vcombine.low %v197, %v203
    %v1295 = vcombine.high %v197, %v203
    %v1297 = vunpack.c.l.s4 1983009808
    %v1298 = vunpack.c.0.s8 %v1297
    %v1299 = vlaneseq
    %v1300 = vshrl.u32 %v1299, 7
    %v1301 = vsub.s32 %v1298, %v1300
    %v1302 = vrot.slane %v1292, %v1301
    %v1304 = vunpack.c.l.s4 1983009808
    %v1305 = vunpack.c.0.s8 %v1304
    %v1306 = vlaneseq
    %v1307 = vshrl.u32 %v1306, 7
    %v1308 = vsub.s32 %v1305, %v1307
    %v1309 = vrot.slane %v1293, %v1308
    %v1311 = vunpack.c.l.s4 1983009808
    %v1312 = vunpack.c.0.s8 %v1311
    %v1313 = vlaneseq
    %v1314 = vshrl.u32 %v1313, 7
    %v1315 = vsub.s32 %v1312, %v1314
    %v1316 = vrot.slane %v1294, %v1315
    %v1318 = vunpack.c.l.s4 1983009808
    %v1319 = vunpack.c.0.s8 %v1318
    %v1320 = vlaneseq
    %v1321 = vshrl.u32 %v1320, 7
    %v1322 = vsub.s32 %v1319, %v1321
    %v1323 = vrot.slane %v1295, %v1322
    %v1324 = vcombine.low %v1302, %v1316
    %v1325 = vcombine.high %v1302, %v1316
    %v1326 = vcombine.low %v1309, %v1323
    %v1327 = vcombine.high %v1309, %v1323
    %v1328 = vcombine.low %v186, %v192
    %v1329 = vcombine.high %v186, %v192
    %v1330 = vcombine.low %v198, %v204
    %v1331 = vcombine.high %v198, %v204
    %v1333 = vunpack.c.l.s4 1983009808
    %v1334 = vunpack.c.0.s8 %v1333
    %v1335 = vlaneseq
    %v1336 = vshrl.u32 %v1335, 7
    %v1337 = vsub.s32 %v1334, %v1336
    %v1338 = vrot.slane %v1328, %v1337
    %v1340 = vunpack.c.l.s4 1983009808
    %v1341 = vunpack.c.0.s8 %v1340
    %v1342 = vlaneseq
    %v1343 = vshrl.u32 %v1342, 7
    %v1344 = vsub.s32 %v1341, %v1343
    %v1345 = vrot.slane %v1329, %v1344
    %v1347 = vunpack.c.l.s4 1983009808
    %v1348 = vunpack.c.0.s8 %v1347
    %v1349 = vlaneseq
    %v1350 = vshrl.u32 %v1349, 7
    %v1351 = vsub.s32 %v1348, %v1350
    %v1352 = vrot.slane %v1330, %v1351
    %v1354 = vunpack.c.l.s4 1983009808
    %v1355 = vunpack.c.0.s8 %v1354
    %v1356 = vlaneseq
    %v1357 = vshrl.u32 %v1356, 7
    %v1358 = vsub.s32 %v1355, %v1357
    %v1359 = vrot.slane %v1331, %v1358
    %v1360 = vcombine.low %v1338, %v1352
    %v1361 = vcombine.high %v1338, %v1352
    %v1362 = vcombine.low %v1345, %v1359
    %v1363 = vcombine.high %v1345, %v1359
    %v1364 = vcombine.low %v205, %v211
    %v1365 = vcombine.high %v205, %v211
    %v1366 = vcombine.low %v217, %v223
    %v1367 = vcombine.high %v217, %v223
    %v1369 = vunpack.c.l.s4 1983009808
    %v1370 = vunpack.c.0.s8 %v1369
    %v1371 = vlaneseq
    %v1372 = vshrl.u32 %v1371, 7
    %v1373 = vsub.s32 %v1370, %v1372
    %v1374 = vrot.slane %v1364, %v1373
    %v1376 = vunpack.c.l.s4 1983009808
    %v1377 = vunpack.c.0.s8 %v1376
    %v1378 = vlaneseq
    %v1379 = vshrl.u32 %v1378, 7
    %v1380 = vsub.s32 %v1377, %v1379
    %v1381 = vrot.slane %v1365, %v1380
    %v1383 = vunpack.c.l.s4 1983009808
    %v1384 = vunpack.c.0.s8 %v1383
    %v1385 = vlaneseq
    %v1386 = vshrl.u32 %v1385, 7
    %v1387 = vsub.s32 %v1384, %v1386
    %v1388 = vrot.slane %v1366, %v1387
    %v1390 = vunpack.c.l.s4 1983009808
    %v1391 = vunpack.c.0.s8 %v1390
    %v1392 = vlaneseq
    %v1393 = vshrl.u32 %v1392, 7
    %v1394 = vsub.s32 %v1391, %v1393
    %v1395 = vrot.slane %v1367, %v1394
    %v1396 = vcombine.low %v1374, %v1388
    %v1397 = vcombine.high %v1374, %v1388
    %v1398 = vcombine.low %v1381, %v1395
    %v1399 = vcombine.high %v1381, %v1395
    %v1400 = vcombine.low %v206, %v212
    %v1401 = vcombine.high %v206, %v212
    %v1402 = vcombine.low %v218, %v224
    %v1403 = vcombine.high %v218, %v224
    %v1405 = vunpack.c.l.s4 1983009808
    %v1406 = vunpack.c.0.s8 %v1405
    %v1407 = vlaneseq
    %v1408 = vshrl.u32 %v1407, 7
    %v1409 = vsub.s32 %v1406, %v1408
    %v1410 = vrot.slane %v1400, %v1409
    %v1412 = vunpack.c.l.s4 1983009808
    %v1413 = vunpack.c.0.s8 %v1412
    %v1414 = vlaneseq
    %v1415 = vshrl.u32 %v1414, 7
    %v1416 = vsub.s32 %v1413, %v1415
    %v1417 = vrot.slane %v1401, %v1416
    %v1419 = vunpack.c.l.s4 1983009808
    %v1420 = vunpack.c.0.s8 %v1419
    %v1421 = vlaneseq
    %v1422 = vshrl.u32 %v1421, 7
    %v1423 = vsub.s32 %v1420, %v1422
    %v1424 = vrot.slane %v1402, %v1423
    %v1426 = vunpack.c.l.s4 1983009808
    %v1427 = vunpack.c.0.s8 %v1426
    %v1428 = vlaneseq
    %v1429 = vshrl.u32 %v1428, 7
    %v1430 = vsub.s32 %v1427, %v1429
    %v1431 = vrot.slane %v1403, %v1430
    %v1432 = vcombine.low %v1410, %v1424
    %v1433 = vcombine.high %v1410, %v1424
    %v1434 = vcombine.low %v1417, %v1431
    %v1435 = vcombine.high %v1417, %v1431
    %v1436 = vcombine.low %v207, %v213
    %v1437 = vcombine.high %v207, %v213
    %v1438 = vcombine.low %v219, %v225
    %v1439 = vcombine.high %v219, %v225
    %v1441 = vunpack.c.l.s4 1983009808
    %v1442 = vunpack.c.0.s8 %v1441
    %v1443 = vlaneseq
    %v1444 = vshrl.u32 %v1443, 7
    %v1445 = vsub.s32 %v1442, %v1444
    %v1446 = vrot.slane %v1436, %v1445
    %v1448 = vunpack.c.l.s4 1983009808
    %v1449 = vunpack.c.0.s8 %v1448
    %v1450 = vlaneseq
    %v1451 = vshrl.u32 %v1450, 7
    %v1452 = vsub.s32 %v1449, %v1451
    %v1453 = vrot.slane %v1437, %v1452
    %v1455 = vunpack.c.l.s4 1983009808
    %v1456 = vunpack.c.0.s8 %v1455
    %v1457 = vlaneseq
    %v1458 = vshrl.u32 %v1457, 7
    %v1459 = vsub.s32 %v1456, %v1458
    %v1460 = vrot.slane %v1438, %v1459
    %v1462 = vunpack.c.l.s4 1983009808
    %v1463 = vunpack.c.0.s8 %v1462
    %v1464 = vlaneseq
    %v1465 = vshrl.u32 %v1464, 7
    %v1466 = vsub.s32 %v1463, %v1465
    %v1467 = vrot.slane %v1439, %v1466
    %v1468 = vcombine.low %v1446, %v1460
    %v1469 = vcombine.high %v1446, %v1460
    %v1470 = vcombine.low %v1453, %v1467
    %v1471 = vcombine.high %v1453, %v1467
    %v1472 = vcombine.low %v208, %v214
    %v1473 = vcombine.high %v208, %v214
    %v1474 = vcombine.low %v220, %v226
    %v1475 = vcombine.high %v220, %v226
    %v1477 = vunpack.c.l.s4 1983009808
    %v1478 = vunpack.c.0.s8 %v1477
    %v1479 = vlaneseq
    %v1480 = vshrl.u32 %v1479, 7
    %v1481 = vsub.s32 %v1478, %v1480
    %v1482 = vrot.slane %v1472, %v1481
    %v1484 = vunpack.c.l.s4 1983009808
    %v1485 = vunpack.c.0.s8 %v1484
    %v1486 = vlaneseq
    %v1487 = vshrl.u32 %v1486, 7
    %v1488 = vsub.s32 %v1485, %v1487
    %v1489 = vrot.slane %v1473, %v1488
    %v1491 = vunpack.c.l.s4 1983009808
    %v1492 = vunpack.c.0.s8 %v1491
    %v1493 = vlaneseq
    %v1494 = vshrl.u32 %v1493, 7
    %v1495 = vsub.s32 %v1492, %v1494
    %v1496 = vrot.slane %v1474, %v1495
    %v1498 = vunpack.c.l.s4 1983009808
    %v1499 = vunpack.c.0.s8 %v1498
    %v1500 = vlaneseq
    %v1501 = vshrl.u32 %v1500, 7
    %v1502 = vsub.s32 %v1499, %v1501
    %v1503 = vrot.slane %v1475, %v1502
    %v1504 = vcombine.low %v1482, %v1496
    %v1505 = vcombine.high %v1482, %v1496
    %v1506 = vcombine.low %v1489, %v1503
    %v1507 = vcombine.high %v1489, %v1503
    %v1508 = vcombine.low %v209, %v215
    %v1509 = vcombine.high %v209, %v215
    %v1510 = vcombine.low %v221, %v227
    %v1511 = vcombine.high %v221, %v227
    %v1513 = vunpack.c.l.s4 1983009808
    %v1514 = vunpack.c.0.s8 %v1513
    %v1515 = vlaneseq
    %v1516 = vshrl.u32 %v1515, 7
    %v1517 = vsub.s32 %v1514, %v1516
    %v1518 = vrot.slane %v1508, %v1517
    %v1520 = vunpack.c.l.s4 1983009808
    %v1521 = vunpack.c.0.s8 %v1520
    %v1522 = vlaneseq
    %v1523 = vshrl.u32 %v1522, 7
    %v1524 = vsub.s32 %v1521, %v1523
    %v1525 = vrot.slane %v1509, %v1524
    %v1527 = vunpack.c.l.s4 1983009808
    %v1528 = vunpack.c.0.s8 %v1527
    %v1529 = vlaneseq
    %v1530 = vshrl.u32 %v1529, 7
    %v1531 = vsub.s32 %v1528, %v1530
    %v1532 = vrot.slane %v1510, %v1531
    %v1534 = vunpack.c.l.s4 1983009808
    %v1535 = vunpack.c.0.s8 %v1534
    %v1536 = vlaneseq
    %v1537 = vshrl.u32 %v1536, 7
    %v1538 = vsub.s32 %v1535, %v1537
    %v1539 = vrot.slane %v1511, %v1538
    %v1540 = vcombine.low %v1518, %v1532
    %v1541 = vcombine.high %v1518, %v1532
    %v1542 = vcombine.low %v1525, %v1539
    %v1543 = vcombine.high %v1525, %v1539
    %v1544 = vcombine.low %v210, %v216
    %v1545 = vcombine.high %v210, %v216
    %v1546 = vcombine.low %v222, %v228
    %v1547 = vcombine.high %v222, %v228
    %v1549 = vunpack.c.l.s4 1983009808
    %v1550 = vunpack.c.0.s8 %v1549
    %v1551 = vlaneseq
    %v1552 = vshrl.u32 %v1551, 7
    %v1553 = vsub.s32 %v1550, %v1552
    %v1554 = vrot.slane %v1544, %v1553
    %v1556 = vunpack.c.l.s4 1983009808
    %v1557 = vunpack.c.0.s8 %v1556
    %v1558 = vlaneseq
    %v1559 = vshrl.u32 %v1558, 7
    %v1560 = vsub.s32 %v1557, %v1559
    %v1561 = vrot.slane %v1545, %v1560
    %v1563 = vunpack.c.l.s4 1983009808
    %v1564 = vunpack.c.0.s8 %v1563
    %v1565 = vlaneseq
    %v1566 = vshrl.u32 %v1565, 7
    %v1567 = vsub.s32 %v1564, %v1566
    %v1568 = vrot.slane %v1546, %v1567
    %v1570 = vunpack.c.l.s4 1983009808
    %v1571 = vunpack.c.0.s8 %v1570
    %v1572 = vlaneseq
    %v1573 = vshrl.u32 %v1572, 7
    %v1574 = vsub.s32 %v1571, %v1573
    %v1575 = vrot.slane %v1547, %v1574
    %v1576 = vcombine.low %v1554, %v1568
    %v1577 = vcombine.high %v1554, %v1568
    %v1578 = vcombine.low %v1561, %v1575
    %v1579 = vcombine.high %v1561, %v1575
    %1676 = vmatprep.subr.mxu0 0.0
    %1677 = vmatpush1.msra.mxu0 %v229
    %1678 = vmatprep.subr.mxu0 0.0
    %1679 = vmatpush1.msra.mxu0 %v230
    %1680 = vmatprep.subr.mxu0 0.0
    %1681 = vmatpush1.msra.mxu0 %v231
    %1682 = vmatprep.subr.mxu0 0.0
    %1683 = vmatpush1.msra.mxu0 %v232
    %1684 = vmatprep.subr.mxu0 0.0
    %1685 = vmatpush1.msra.mxu0 %v233
    %1686 = vmatprep.subr.mxu0 0.0
    %1687 = vmatpush1.msra.mxu0 %v234
    %1688 = vmatprep.subr.mxu0 0.0
    %1689 = vmatpush1.msra.mxu0 %v235
    %1690 = vmatprep.subr.mxu0 0.0
    %1691 = vmatpush1.msra.mxu0 %v236
    %1692 = vmatprep.subr.mxu0 0.0
    %1693 = vmatpush1.msra.mxu0 %v237
    %1694 = vmatprep.subr.mxu0 0.0
    %1695 = vmatpush1.msra.mxu0 %v238
    %1696 = vmatprep.subr.mxu0 0.0
    %1697 = vmatpush1.msra.mxu0 %v239
    %1698 = vmatprep.subr.mxu0 0.0
    %1699 = vmatpush1.msra.mxu0 %v240
    %1700 = vmatprep.subr.mxu0 0.0
    %1701 = vmatpush1.msra.mxu0 %v241
    %1702 = vmatprep.subr.mxu0 0.0
    %1703 = vmatpush1.msra.mxu0 %v242
    %1704 = vmatprep.subr.mxu0 0.0
    %1705 = vmatpush1.msra.mxu0 %v243
    %1706 = vmatprep.subr.mxu0 0.0
    %1707 = vmatpush1.msra.mxu0 %v244
    %1708 = vmatprep.subr.mxu0 0.0
    %1709 = vmatpush1.msra.mxu0 %v245
    %1710 = vmatprep.subr.mxu0 0.0
    %1711 = vmatpush1.msra.mxu0 %v246
    %1712 = vmatprep.subr.mxu0 0.0
    %1713 = vmatpush1.msra.mxu0 %v247
    %1714 = vmatprep.subr.mxu0 0.0
    %1715 = vmatpush1.msra.mxu0 %v248
    %1716 = vmatprep.subr.mxu0 0.0
    %1717 = vmatpush1.msra.mxu0 %v249
    %1718 = vmatprep.subr.mxu0 0.0
    %1719 = vmatpush1.msra.mxu0 %v250
    %1720 = vmatprep.subr.mxu0 0.0
    %1721 = vmatpush1.msra.mxu0 %v251
    %1722 = vmatprep.subr.mxu0 0.0
    %1723 = vmatpush1.msra.mxu0 %v252
    %1724 = vmatprep.subr.mxu0 0.0
    %1725 = vmatpush1.msra.mxu0 %v253
    %1726 = vmatprep.subr.mxu0 0.0
    %1727 = vmatpush1.msra.mxu0 %v254
    %1728 = vmatprep.subr.mxu0 0.0
    %1729 = vmatpush1.msra.mxu0 %v255
    %1730 = vmatprep.subr.mxu0 0.0
    %1731 = vmatpush1.msra.mxu0 %v256
    %1732 = vmatprep.subr.mxu0 0.0
    %1733 = vmatpush1.msra.mxu0 %v257
    %1734 = vmatprep.subr.mxu0 0.0
    %1735 = vmatpush1.msra.mxu0 %v258
    %1736 = vmatprep.subr.mxu0 0.0
    %1737 = vmatpush1.msra.mxu0 %v259
    %1738 = vmatprep.subr.mxu0 0.0
    %1739 = vmatpush1.msra.mxu0 %v260
    %1740 = vmatprep.mubr.f32.mxu0 %v749
    %1741 = vmatmul.mubr.f32.gmra.mrb[0].mxu0 %v748
    %v1742 = vpop.f32.mrb[0].mxu0
    %v1743 = vadd.f32 %v618, %v1742
    %v1744 = vpop.f32.mrb[0].mxu0
    %1745 = vmatprep.mubr.f32.mxu0 %v965
    %1746 = vmatmul.mubr.f32.gmra.mrb[0].mxu0 %v964
    %v1747 = vpop.f32.mrb[0].mxu0
    %v1748 = vadd.f32 %v618, %v1747
    %v1749 = vpop.f32.mrb[0].mxu0
    %1750 = vmatprep.mubr.f32.mxu0 %v1181
    %1751 = vmatmul.mubr.f32.gmra.mrb[0].mxu0 %v1180
    %v1752 = vpop.f32.mrb[0].mxu0
    %v1753 = vadd.f32 %v618, %v1752
    %v1754 = vpop.f32.mrb[0].mxu0
    %1755 = vmatprep.mubr.f32.mxu0 %v1397
    %1756 = vmatmul.mubr.f32.gmra.mrb[0].mxu0 %v1396
    %v1757 = vpop.f32.mrb[0].mxu0
    %v1758 = vadd.f32 %v618, %v1757
    %v1759 = vpop.f32.mrb[0].mxu0
    %1760 = vdwg.mxu0
    %1761 = vmatprep.subr.mxu0 0.0
    %1762 = vmatpush1.msra.mxu0 %v261
    %1763 = vmatprep.subr.mxu0 0.0
    %1764 = vmatpush1.msra.mxu0 %v262
    %1765 = vmatprep.subr.mxu0 0.0
    %1766 = vmatpush1.msra.mxu0 %v263
    %1767 = vmatprep.subr.mxu0 0.0
    %1768 = vmatpush1.msra.mxu0 %v264
    %1769 = vmatprep.subr.mxu0 0.0
    %1770 = vmatpush1.msra.mxu0 %v265
    %1771 = vmatprep.subr.mxu0 0.0
    %1772 = vmatpush1.msra.mxu0 %v266
    %1773 = vmatprep.subr.mxu0 0.0
    %1774 = vmatpush1.msra.mxu0 %v267
    %1775 = vmatprep.subr.mxu0 0.0
    %1776 = vmatpush1.msra.mxu0 %v268
    %1777 = vmatprep.subr.mxu0 0.0
    %1778 = vmatpush1.msra.mxu0 %v269
    %1779 = vmatprep.subr.mxu0 0.0
    %1780 = vmatpush1.msra.mxu0 %v270
    %1781 = vmatprep.subr.mxu0 0.0
    %1782 = vmatpush1.msra.mxu0 %v271
    %1783 = vmatprep.subr.mxu0 0.0
    %1784 = vmatpush1.msra.mxu0 %v272
    %1785 = vmatprep.subr.mxu0 0.0
    %1786 = vmatpush1.msra.mxu0 %v273
    %1787 = vmatprep.subr.mxu0 0.0
    %1788 = vmatpush1.msra.mxu0 %v274
    %1789 = vmatprep.subr.mxu0 0.0
    %1790 = vmatpush1.msra.mxu0 %v275
    %1791 = vmatprep.subr.mxu0 0.0
    %1792 = vmatpush1.msra.mxu0 %v276
    %1793 = vmatprep.subr.mxu0 0.0
    %1794 = vmatpush1.msra.mxu0 %v277
    %1795 = vmatprep.subr.mxu0 0.0
    %1796 = vmatpush1.msra.mxu0 %v278
    %1797 = vmatprep.subr.mxu0 0.0
    %1798 = vmatpush1.msra.mxu0 %v279
    %1799 = vmatprep.subr.mxu0 0.0
    %1800 = vmatpush1.msra.mxu0 %v280
    %1801 = vmatprep.subr.mxu0 0.0
    %1802 = vmatpush1.msra.mxu0 %v281
    %1803 = vmatprep.subr.mxu0 0.0
    %1804 = vmatpush1.msra.mxu0 %v282
    %1805 = vmatprep.subr.mxu0 0.0
    %1806 = vmatpush1.msra.mxu0 %v283
    %1807 = vmatprep.subr.mxu0 0.0
    %1808 = vmatpush1.msra.mxu0 %v284
    %1809 = vmatprep.subr.mxu0 0.0
    %1810 = vmatpush1.msra.mxu0 %v285
    %1811 = vmatprep.subr.mxu0 0.0
    %1812 = vmatpush1.msra.mxu0 %v286
    %1813 = vmatprep.subr.mxu0 0.0
    %1814 = vmatpush1.msra.mxu0 %v287
    %1815 = vmatprep.subr.mxu0 0.0
    %1816 = vmatpush1.msra.mxu0 %v288
    %1817 = vmatprep.subr.mxu0 0.0
    %1818 = vmatpush1.msra.mxu0 %v289
    %1819 = vmatprep.subr.mxu0 0.0
    %1820 = vmatpush1.msra.mxu0 %v290
    %1821 = vmatprep.subr.mxu0 0.0
    %1822 = vmatpush1.msra.mxu0 %v291
    %1823 = vmatprep.subr.mxu0 0.0
    %1824 = vmatpush1.msra.mxu0 %v292
    %1825 = vmatprep.mubr.f32.mxu0 %v751
    %1826 = vmatmul.mubr.f32.gmra.mrb[0].mxu0 %v750
    %v1827 = vpop.f32.mrb[0].mxu0
    %v1828 = vadd.f32 %v1743, %v1827
    %v1829 = vpop.f32.mrb[0].mxu0
    %1830 = vmatprep.mubr.f32.mxu0 %v967
    %1831 = vmatmul.mubr.f32.gmra.mrb[0].mxu0 %v966
    %v1832 = vpop.f32.mrb[0].mxu0
    %v1833 = vadd.f32 %v1748, %v1832
    %v1834 = vpop.f32.mrb[0].mxu0
    %1835 = vmatprep.mubr.f32.mxu0 %v1183
    %1836 = vmatmul.mubr.f32.gmra.mrb[0].mxu0 %v1182
    %v1837 = vpop.f32.mrb[0].mxu0
    %v1838 = vadd.f32 %v1753, %v1837
    %v1839 = vpop.f32.mrb[0].mxu0
    %1840 = vmatprep.mubr.f32.mxu0 %v1399
    %1841 = vmatmul.mubr.f32.gmra.mrb[0].mxu0 %v1398
    %v1842 = vpop.f32.mrb[0].mxu0
    %v1843 = vadd.f32 %v1758, %v1842
    %v1844 = vpop.f32.mrb[0].mxu0
    %1845 = vdwg.mxu0
    %1846 = vmatprep.subr.mxu0 0.0
    %1847 = vmatpush1.msra.mxu0 %v293
    %1848 = vmatprep.subr.mxu0 0.0
    %1849 = vmatpush1.msra.mxu0 %v294
    %1850 = vmatprep.subr.mxu0 0.0
    %1851 = vmatpush1.msra.mxu0 %v295
    %1852 = vmatprep.subr.mxu0 0.0
    %1853 = vmatpush1.msra.mxu0 %v296
    %1854 = vmatprep.subr.mxu0 0.0
    %1855 = vmatpush1.msra.mxu0 %v297
    %1856 = vmatprep.subr.mxu0 0.0
    %1857 = vmatpush1.msra.mxu0 %v298
    %1858 = vmatprep.subr.mxu0 0.0
    %1859 = vmatpush1.msra.mxu0 %v299
    %1860 = vmatprep.subr.mxu0 0.0
    %1861 = vmatpush1.msra.mxu0 %v300
    %1862 = vmatprep.subr.mxu0 0.0
    %1863 = vmatpush1.msra.mxu0 %v301
    %1864 = vmatprep.subr.mxu0 0.0
    %1865 = vmatpush1.msra.mxu0 %v302
    %1866 = vmatprep.subr.mxu0 0.0
    %1867 = vmatpush1.msra.mxu0 %v303
    %1868 = vmatprep.subr.mxu0 0.0
    %1869 = vmatpush1.msra.mxu0 %v304
    %1870 = vmatprep.subr.mxu0 0.0
    %1871 = vmatpush1.msra.mxu0 %v305
    %1872 = vmatprep.subr.mxu0 0.0
    %1873 = vmatpush1.msra.mxu0 %v306
    %1874 = vmatprep.subr.mxu0 0.0
    %1875 = vmatpush1.msra.mxu0 %v307
    %1876 = vmatprep.subr.mxu0 0.0
    %1877 = vmatpush1.msra.mxu0 %v308
    %1878 = vmatprep.subr.mxu0 0.0
    %1879 = vmatpush1.msra.mxu0 %v309
    %1880 = vmatprep.subr.mxu0 0.0
    %1881 = vmatpush1.msra.mxu0 %v310
    %1882 = vmatprep.subr.mxu0 0.0
    %1883 = vmatpush1.msra.mxu0 %v311
    %1884 = vmatprep.subr.mxu0 0.0
    %1885 = vmatpush1.msra.mxu0 %v312
    %1886 = vmatprep.subr.mxu0 0.0
    %1887 = vmatpush1.msra.mxu0 %v313
    %1888 = vmatprep.subr.mxu0 0.0
    %1889 = vmatpush1.msra.mxu0 %v314
    %1890 = vmatprep.subr.mxu0 0.0
    %1891 = vmatpush1.msra.mxu0 %v315
    %1892 = vmatprep.subr.mxu0 0.0
    %1893 = vmatpush1.msra.mxu0 %v316
    %1894 = vmatprep.subr.mxu0 0.0
    %1895 = vmatpush1.msra.mxu0 %v317
    %1896 = vmatprep.subr.mxu0 0.0
    %1897 = vmatpush1.msra.mxu0 %v318
    %1898 = vmatprep.subr.mxu0 0.0
    %1899 = vmatpush1.msra.mxu0 %v319
    %1900 = vmatprep.subr.mxu0 0.0
    %1901 = vmatpush1.msra.mxu0 %v320
    %1902 = vmatprep.subr.mxu0 0.0
    %1903 = vmatpush1.msra.mxu0 %v321
    %1904 = vmatprep.subr.mxu0 0.0
    %1905 = vmatpush1.msra.mxu0 %v322
    %1906 = vmatprep.subr.mxu0 0.0
    %1907 = vmatpush1.msra.mxu0 %v323
    %1908 = vmatprep.subr.mxu0 0.0
    %1909 = vmatpush1.msra.mxu0 %v324
    %1910 = vmatprep.mubr.f32.mxu0 %v785
    %1911 = vmatmul.mubr.f32.gmra.mrb[0].mxu0 %v784
    %v1912 = vpop.f32.mrb[0].mxu0
    %v1913 = vadd.f32 %v1828, %v1912
    %v1914 = vpop.f32.mrb[0].mxu0
    %1915 = vmatprep.mubr.f32.mxu0 %v1001
    %1916 = vmatmul.mubr.f32.gmra.mrb[0].mxu0 %v1000
    %v1917 = vpop.f32.mrb[0].mxu0
    %v1918 = vadd.f32 %v1833, %v1917
    %v1919 = vpop.f32.mrb[0].mxu0
    %1920 = vmatprep.mubr.f32.mxu0 %v1217
    %1921 = vmatmul.mubr.f32.gmra.mrb[0].mxu0 %v1216
    %v1922 = vpop.f32.mrb[0].mxu0
    %v1923 = vadd.f32 %v1838, %v1922
    %v1924 = vpop.f32.mrb[0].mxu0
    %1925 = vmatprep.mubr.f32.mxu0 %v1433
    %1926 = vmatmul.mubr.f32.gmra.mrb[0].mxu0 %v1432
    %v1927 = vpop.f32.mrb[0].mxu0
    %v1928 = vadd.f32 %v1843, %v1927
    %v1929 = vpop.f32.mrb[0].mxu0
    %1930 = vdwg.mxu0
    %1931 = vmatprep.subr.mxu0 0.0
    %1932 = vmatpush1.msra.mxu0 %v325
    %1933 = vmatprep.subr.mxu0 0.0
    %1934 = vmatpush1.msra.mxu0 %v326
    %1935 = vmatprep.subr.mxu0 0.0
    %1936 = vmatpush1.msra.mxu0 %v327
    %1937 = vmatprep.subr.mxu0 0.0
    %1938 = vmatpush1.msra.mxu0 %v328
    %1939 = vmatprep.subr.mxu0 0.0
    %1940 = vmatpush1.msra.mxu0 %v329
    %1941 = vmatprep.subr.mxu0 0.0
    %1942 = vmatpush1.msra.mxu0 %v330
    %1943 = vmatprep.subr.mxu0 0.0
    %1944 = vmatpush1.msra.mxu0 %v331
    %1945 = vmatprep.subr.mxu0 0.0
    %1946 = vmatpush1.msra.mxu0 %v332
    %1947 = vmatprep.subr.mxu0 0.0
    %1948 = vmatpush1.msra.mxu0 %v333
    %1949 = vmatprep.subr.mxu0 0.0
    %1950 = vmatpush1.msra.mxu0 %v334
    %1951 = vmatprep.subr.mxu0 0.0
    %1952 = vmatpush1.msra.mxu0 %v335
    %1953 = vmatprep.subr.mxu0 0.0
    %1954 = vmatpush1.msra.mxu0 %v336
    %1955 = vmatprep.subr.mxu0 0.0
    %1956 = vmatpush1.msra.mxu0 %v337
    %1957 = vmatprep.subr.mxu0 0.0
    %1958 = vmatpush1.msra.mxu0 %v338
    %1959 = vmatprep.subr.mxu0 0.0
    %1960 = vmatpush1.msra.mxu0 %v339
    %1961 = vmatprep.subr.mxu0 0.0
    %1962 = vmatpush1.msra.mxu0 %v340
    %1963 = vmatprep.subr.mxu0 0.0
    %1964 = vmatpush1.msra.mxu0 %v341
    %1965 = vmatprep.subr.mxu0 0.0
    %1966 = vmatpush1.msra.mxu0 %v342
    %1967 = vmatprep.subr.mxu0 0.0
    %1968 = vmatpush1.msra.mxu0 %v343
    %1969 = vmatprep.subr.mxu0 0.0
    %1970 = vmatpush1.msra.mxu0 %v344
    %1971 = vmatprep.subr.mxu0 0.0
    %1972 = vmatpush1.msra.mxu0 %v345
    %1973 = vmatprep.subr.mxu0 0.0
    %1974 = vmatpush1.msra.mxu0 %v346
    %1975 = vmatprep.subr.mxu0 0.0
    %1976 = vmatpush1.msra.mxu0 %v347
    %1977 = vmatprep.subr.mxu0 0.0
    %1978 = vmatpush1.msra.mxu0 %v348
    %1979 = vmatprep.subr.mxu0 0.0
    %1980 = vmatpush1.msra.mxu0 %v349
    %1981 = vmatprep.subr.mxu0 0.0
    %1982 = vmatpush1.msra.mxu0 %v350
    %1983 = vmatprep.subr.mxu0 0.0
    %1984 = vmatpush1.msra.mxu0 %v351
    %1985 = vmatprep.subr.mxu0 0.0
    %1986 = vmatpush1.msra.mxu0 %v352
    %1987 = vmatprep.subr.mxu0 0.0
    %1988 = vmatpush1.msra.mxu0 %v353
    %1989 = vmatprep.subr.mxu0 0.0
    %1990 = vmatpush1.msra.mxu0 %v354
    %1991 = vmatprep.subr.mxu0 0.0
    %1992 = vmatpush1.msra.mxu0 %v355
    %1993 = vmatprep.subr.mxu0 0.0
    %1994 = vmatpush1.msra.mxu0 %v356
    %1995 = vmatprep.mubr.f32.mxu0 %v787
    %1996 = vmatmul.mubr.f32.gmra.mrb[0].mxu0 %v786
    %v1997 = vpop.f32.mrb[0].mxu0
    %v1998 = vadd.f32 %v1913, %v1997
    %v1999 = vpop.f32.mrb[0].mxu0
    %2000 = vmatprep.mubr.f32.mxu0 %v1003
    %2001 = vmatmul.mubr.f32.gmra.mrb[0].mxu0 %v1002
    %v2002 = vpop.f32.mrb[0].mxu0
    %v2003 = vadd.f32 %v1918, %v2002
    %v2004 = vpop.f32.mrb[0].mxu0
    %2005 = vmatprep.mubr.f32.mxu0 %v1219
    %2006 = vmatmul.mubr.f32.gmra.mrb[0].mxu0 %v1218
    %v2007 = vpop.f32.mrb[0].mxu0
    %v2008 = vadd.f32 %v1923, %v2007
    %v2009 = vpop.f32.mrb[0].mxu0
    %2010 = vmatprep.mubr.f32.mxu0 %v1435
    %2011 = vmatmul.mubr.f32.gmra.mrb[0].mxu0 %v1434
    %v2012 = vpop.f32.mrb[0].mxu0
    %v2013 = vadd.f32 %v1928, %v2012
    %v2014 = vpop.f32.mrb[0].mxu0
    %2015 = vdwg.mxu0
    %2016 = vmatprep.subr.mxu0 0.0
    %2017 = vmatpush1.msra.mxu0 %v357
    %2018 = vmatprep.subr.mxu0 0.0
    %2019 = vmatpush1.msra.mxu0 %v358
    %2020 = vmatprep.subr.mxu0 0.0
    %2021 = vmatpush1.msra.mxu0 %v359
    %2022 = vmatprep.subr.mxu0 0.0
    %2023 = vmatpush1.msra.mxu0 %v360
    %2024 = vmatprep.subr.mxu0 0.0
    %2025 = vmatpush1.msra.mxu0 %v361
    %2026 = vmatprep.subr.mxu0 0.0
    %2027 = vmatpush1.msra.mxu0 %v362
    %2028 = vmatprep.subr.mxu0 0.0
    %2029 = vmatpush1.msra.mxu0 %v363
    %2030 = vmatprep.subr.mxu0 0.0
    %2031 = vmatpush1.msra.mxu0 %v364
    %2032 = vmatprep.subr.mxu0 0.0
    %2033 = vmatpush1.msra.mxu0 %v365
    %2034 = vmatprep.subr.mxu0 0.0
    %2035 = vmatpush1.msra.mxu0 %v366
    %2036 = vmatprep.subr.mxu0 0.0
    %2037 = vmatpush1.msra.mxu0 %v367
    %2038 = vmatprep.subr.mxu0 0.0
    %2039 = vmatpush1.msra.mxu0 %v368
    %2040 = vmatprep.subr.mxu0 0.0
    %2041 = vmatpush1.msra.mxu0 %v369
    %2042 = vmatprep.subr.mxu0 0.0
    %2043 = vmatpush1.msra.mxu0 %v370
    %2044 = vmatprep.subr.mxu0 0.0
    %2045 = vmatpush1.msra.mxu0 %v371
    %2046 = vmatprep.subr.mxu0 0.0
    %2047 = vmatpush1.msra.mxu0 %v372
    %2048 = vmatprep.subr.mxu0 0.0
    %2049 = vmatpush1.msra.mxu0 %v373
    %2050 = vmatprep.subr.mxu0 0.0
    %2051 = vmatpush1.msra.mxu0 %v374
    %2052 = vmatprep.subr.mxu0 0.0
    %2053 = vmatpush1.msra.mxu0 %v375
    %2054 = vmatprep.subr.mxu0 0.0
    %2055 = vmatpush1.msra.mxu0 %v376
    %2056 = vmatprep.subr.mxu0 0.0
    %2057 = vmatpush1.msra.mxu0 %v377
    %2058 = vmatprep.subr.mxu0 0.0
    %2059 = vmatpush1.msra.mxu0 %v378
    %2060 = vmatprep.subr.mxu0 0.0
    %2061 = vmatpush1.msra.mxu0 %v379
    %2062 = vmatprep.subr.mxu0 0.0
    %2063 = vmatpush1.msra.mxu0 %v380
    %2064 = vmatprep.subr.mxu0 0.0
    %2065 = vmatpush1.msra.mxu0 %v381
    %2066 = vmatprep.subr.mxu0 0.0
    %2067 = vmatpush1.msra.mxu0 %v382
    %2068 = vmatprep.subr.mxu0 0.0
    %2069 = vmatpush1.msra.mxu0 %v383
    %2070 = vmatprep.subr.mxu0 0.0
    %2071 = vmatpush1.msra.mxu0 %v384
    %2072 = vmatprep.subr.mxu0 0.0
    %2073 = vmatpush1.msra.mxu0 %v385
    %2074 = vmatprep.subr.mxu0 0.0
    %2075 = vmatpush1.msra.mxu0 %v386
    %2076 = vmatprep.subr.mxu0 0.0
    %2077 = vmatpush1.msra.mxu0 %v387
    %2078 = vmatprep.subr.mxu0 0.0
    %2079 = vmatpush1.msra.mxu0 %v388
    %2080 = vmatprep.mubr.f32.mxu0 %v821
    %2081 = vmatmul.mubr.f32.gmra.mrb[0].mxu0 %v820
    %v2082 = vpop.f32.mrb[0].mxu0
    %v2083 = vadd.f32 %v1998, %v2082
    %v2084 = vpop.f32.mrb[0].mxu0
    %2085 = vmatprep.mubr.f32.mxu0 %v1037
    %2086 = vmatmul.mubr.f32.gmra.mrb[0].mxu0 %v1036
    %v2087 = vpop.f32.mrb[0].mxu0
    %v2088 = vadd.f32 %v2003, %v2087
    %v2089 = vpop.f32.mrb[0].mxu0
    %2090 = vmatprep.mubr.f32.mxu0 %v1253
    %2091 = vmatmul.mubr.f32.gmra.mrb[0].mxu0 %v1252
    %v2092 = vpop.f32.mrb[0].mxu0
    %v2093 = vadd.f32 %v2008, %v2092
    %v2094 = vpop.f32.mrb[0].mxu0
    %2095 = vmatprep.mubr.f32.mxu0 %v1469
    %2096 = vmatmul.mubr.f32.gmra.mrb[0].mxu0 %v1468
    %v2097 = vpop.f32.mrb[0].mxu0
    %v2098 = vadd.f32 %v2013, %v2097
    %v2099 = vpop.f32.mrb[0].mxu0
    %2100 = vdwg.mxu0
    %2101 = vmatprep.subr.mxu0 0.0
    %2102 = vmatpush1.msra.mxu0 %v389
    %2103 = vmatprep.subr.mxu0 0.0
    %2104 = vmatpush1.msra.mxu0 %v390
    %2105 = vmatprep.subr.mxu0 0.0
    %2106 = vmatpush1.msra.mxu0 %v391
    %2107 = vmatprep.subr.mxu0 0.0
    %2108 = vmatpush1.msra.mxu0 %v392
    %2109 = vmatprep.subr.mxu0 0.0
    %2110 = vmatpush1.msra.mxu0 %v393
    %2111 = vmatprep.subr.mxu0 0.0
    %2112 = vmatpush1.msra.mxu0 %v394
    %2113 = vmatprep.subr.mxu0 0.0
    %2114 = vmatpush1.msra.mxu0 %v395
    %2115 = vmatprep.subr.mxu0 0.0
    %2116 = vmatpush1.msra.mxu0 %v396
    %2117 = vmatprep.subr.mxu0 0.0
    %2118 = vmatpush1.msra.mxu0 %v397
    %2119 = vmatprep.subr.mxu0 0.0
    %2120 = vmatpush1.msra.mxu0 %v398
    %2121 = vmatprep.subr.mxu0 0.0
    %2122 = vmatpush1.msra.mxu0 %v399
    %2123 = vmatprep.subr.mxu0 0.0
    %2124 = vmatpush1.msra.mxu0 %v400
    %2125 = vmatprep.subr.mxu0 0.0
    %2126 = vmatpush1.msra.mxu0 %v401
    %2127 = vmatprep.subr.mxu0 0.0
    %2128 = vmatpush1.msra.mxu0 %v402
    %2129 = vmatprep.subr.mxu0 0.0
    %2130 = vmatpush1.msra.mxu0 %v403
    %2131 = vmatprep.subr.mxu0 0.0
    %2132 = vmatpush1.msra.mxu0 %v404
    %2133 = vmatprep.subr.mxu0 0.0
    %2134 = vmatpush1.msra.mxu0 %v405
    %2135 = vmatprep.subr.mxu0 0.0
    %2136 = vmatpush1.msra.mxu0 %v406
    %2137 = vmatprep.subr.mxu0 0.0
    %2138 = vmatpush1.msra.mxu0 %v407
    %2139 = vmatprep.subr.mxu0 0.0
    %2140 = vmatpush1.msra.mxu0 %v408
    %2141 = vmatprep.subr.mxu0 0.0
    %2142 = vmatpush1.msra.mxu0 %v409
    %2143 = vmatprep.subr.mxu0 0.0
    %2144 = vmatpush1.msra.mxu0 %v410
    %2145 = vmatprep.subr.mxu0 0.0
    %2146 = vmatpush1.msra.mxu0 %v411
    %2147 = vmatprep.subr.mxu0 0.0
    %2148 = vmatpush1.msra.mxu0 %v412
    %2149 = vmatprep.subr.mxu0 0.0
    %2150 = vmatpush1.msra.mxu0 %v413
    %2151 = vmatprep.subr.mxu0 0.0
    %2152 = vmatpush1.msra.mxu0 %v414
    %2153 = vmatprep.subr.mxu0 0.0
    %2154 = vmatpush1.msra.mxu0 %v415
    %2155 = vmatprep.subr.mxu0 0.0
    %2156 = vmatpush1.msra.mxu0 %v416
    %2157 = vmatprep.subr.mxu0 0.0
    %2158 = vmatpush1.msra.mxu0 %v417
    %2159 = vmatprep.subr.mxu0 0.0
    %2160 = vmatpush1.msra.mxu0 %v418
    %2161 = vmatprep.subr.mxu0 0.0
    %2162 = vmatpush1.msra.mxu0 %v419
    %2163 = vmatprep.subr.mxu0 0.0
    %2164 = vmatpush1.msra.mxu0 %v420
    %2165 = vmatprep.mubr.f32.mxu0 %v823
    %2166 = vmatmul.mubr.f32.gmra.mrb[0].mxu0 %v822
    %v2167 = vpop.f32.mrb[0].mxu0
    %v2168 = vadd.f32 %v2083, %v2167
    %v2169 = vpop.f32.mrb[0].mxu0
    %2170 = vmatprep.mubr.f32.mxu0 %v1039
    %2171 = vmatmul.mubr.f32.gmra.mrb[0].mxu0 %v1038
    %v2172 = vpop.f32.mrb[0].mxu0
    %v2173 = vadd.f32 %v2088, %v2172
    %v2174 = vpop.f32.mrb[0].mxu0
    %2175 = vmatprep.mubr.f32.mxu0 %v1255
    %2176 = vmatmul.mubr.f32.gmra.mrb[0].mxu0 %v1254
    %v2177 = vpop.f32.mrb[0].mxu0
    %v2178 = vadd.f32 %v2093, %v2177
    %v2179 = vpop.f32.mrb[0].mxu0
    %2180 = vmatprep.mubr.f32.mxu0 %v1471
    %2181 = vmatmul.mubr.f32.gmra.mrb[0].mxu0 %v1470
    %v2182 = vpop.f32.mrb[0].mxu0
    %v2183 = vadd.f32 %v2098, %v2182
    %v2184 = vpop.f32.mrb[0].mxu0
    %2185 = vdwg.mxu0
    %2186 = vmatprep.subr.mxu0 0.0
    %2187 = vmatpush1.msra.mxu0 %v421
    %2188 = vmatprep.subr.mxu0 0.0
    %2189 = vmatpush1.msra.mxu0 %v422
    %2190 = vmatprep.subr.mxu0 0.0
    %2191 = vmatpush1.msra.mxu0 %v423
    %2192 = vmatprep.subr.mxu0 0.0
    %2193 = vmatpush1.msra.mxu0 %v424
    %2194 = vmatprep.subr.mxu0 0.0
    %2195 = vmatpush1.msra.mxu0 %v425
    %2196 = vmatprep.subr.mxu0 0.0
    %2197 = vmatpush1.msra.mxu0 %v426
    %2198 = vmatprep.subr.mxu0 0.0
    %2199 = vmatpush1.msra.mxu0 %v427
    %2200 = vmatprep.subr.mxu0 0.0
    %2201 = vmatpush1.msra.mxu0 %v428
    %2202 = vmatprep.subr.mxu0 0.0
    %2203 = vmatpush1.msra.mxu0 %v429
    %2204 = vmatprep.subr.mxu0 0.0
    %2205 = vmatpush1.msra.mxu0 %v430
    %2206 = vmatprep.subr.mxu0 0.0
    %2207 = vmatpush1.msra.mxu0 %v431
    %2208 = vmatprep.subr.mxu0 0.0
    %2209 = vmatpush1.msra.mxu0 %v432
    %2210 = vmatprep.subr.mxu0 0.0
    %2211 = vmatpush1.msra.mxu0 %v433
    %2212 = vmatprep.subr.mxu0 0.0
    %2213 = vmatpush1.msra.mxu0 %v434
    %2214 = vmatprep.subr.mxu0 0.0
    %2215 = vmatpush1.msra.mxu0 %v435
    %2216 = vmatprep.subr.mxu0 0.0
    %2217 = vmatpush1.msra.mxu0 %v436
    %2218 = vmatprep.subr.mxu0 0.0
    %2219 = vmatpush1.msra.mxu0 %v437
    %2220 = vmatprep.subr.mxu0 0.0
    %2221 = vmatpush1.msra.mxu0 %v438
    %2222 = vmatprep.subr.mxu0 0.0
    %2223 = vmatpush1.msra.mxu0 %v439
    %2224 = vmatprep.subr.mxu0 0.0
    %2225 = vmatpush1.msra.mxu0 %v440
    %2226 = vmatprep.subr.mxu0 0.0
    %2227 = vmatpush1.msra.mxu0 %v441
    %2228 = vmatprep.subr.mxu0 0.0
    %2229 = vmatpush1.msra.mxu0 %v442
    %2230 = vmatprep.subr.mxu0 0.0
    %2231 = vmatpush1.msra.mxu0 %v443
    %2232 = vmatprep.subr.mxu0 0.0
    %2233 = vmatpush1.msra.mxu0 %v444
    %2234 = vmatprep.subr.mxu0 0.0
    %2235 = vmatpush1.msra.mxu0 %v445
    %2236 = vmatprep.subr.mxu0 0.0
    %2237 = vmatpush1.msra.mxu0 %v446
    %2238 = vmatprep.subr.mxu0 0.0
    %2239 = vmatpush1.msra.mxu0 %v447
    %2240 = vmatprep.subr.mxu0 0.0
    %2241 = vmatpush1.msra.mxu0 %v448
    %2242 = vmatprep.subr.mxu0 0.0
    %2243 = vmatpush1.msra.mxu0 %v449
    %2244 = vmatprep.subr.mxu0 0.0
    %2245 = vmatpush1.msra.mxu0 %v450
    %2246 = vmatprep.subr.mxu0 0.0
    %2247 = vmatpush1.msra.mxu0 %v451
    %2248 = vmatprep.subr.mxu0 0.0
    %2249 = vmatpush1.msra.mxu0 %v452
    %2250 = vmatprep.mubr.f32.mxu0 %v857
    %2251 = vmatmul.mubr.f32.gmra.mrb[0].mxu0 %v856
    %v2252 = vpop.f32.mrb[0].mxu0
    %v2253 = vadd.f32 %v2168, %v2252
    %v2254 = vpop.f32.mrb[0].mxu0
    %2255 = vmatprep.mubr.f32.mxu0 %v1073
    %2256 = vmatmul.mubr.f32.gmra.mrb[0].mxu0 %v1072
    %v2257 = vpop.f32.mrb[0].mxu0
    %v2258 = vadd.f32 %v2173, %v2257
    %v2259 = vpop.f32.mrb[0].mxu0
    %2260 = vmatprep.mubr.f32.mxu0 %v1289
    %2261 = vmatmul.mubr.f32.gmra.mrb[0].mxu0 %v1288
    %v2262 = vpop.f32.mrb[0].mxu0
    %v2263 = vadd.f32 %v2178, %v2262
    %v2264 = vpop.f32.mrb[0].mxu0
    %2265 = vmatprep.mubr.f32.mxu0 %v1505
    %2266 = vmatmul.mubr.f32.gmra.mrb[0].mxu0 %v1504
    %v2267 = vpop.f32.mrb[0].mxu0
    %v2268 = vadd.f32 %v2183, %v2267
    %v2269 = vpop.f32.mrb[0].mxu0
    %2270 = vdwg.mxu0
    %2271 = vmatprep.subr.mxu0 0.0
    %2272 = vmatpush1.msra.mxu0 %v453
    %2273 = vmatprep.subr.mxu0 0.0
    %2274 = vmatpush1.msra.mxu0 %v454
    %2275 = vmatprep.subr.mxu0 0.0
    %2276 = vmatpush1.msra.mxu0 %v455
    %2277 = vmatprep.subr.mxu0 0.0
    %2278 = vmatpush1.msra.mxu0 %v456
    %2279 = vmatprep.subr.mxu0 0.0
    %2280 = vmatpush1.msra.mxu0 %v457
    %2281 = vmatprep.subr.mxu0 0.0
    %2282 = vmatpush1.msra.mxu0 %v458
    %2283 = vmatprep.subr.mxu0 0.0
    %2284 = vmatpush1.msra.mxu0 %v459
    %2285 = vmatprep.subr.mxu0 0.0
    %2286 = vmatpush1.msra.mxu0 %v460
    %2287 = vmatprep.subr.mxu0 0.0
    %2288 = vmatpush1.msra.mxu0 %v461
    %2289 = vmatprep.subr.mxu0 0.0
    %2290 = vmatpush1.msra.mxu0 %v462
    %2291 = vmatprep.subr.mxu0 0.0
    %2292 = vmatpush1.msra.mxu0 %v463
    %2293 = vmatprep.subr.mxu0 0.0
    %2294 = vmatpush1.msra.mxu0 %v464
    %2295 = vmatprep.subr.mxu0 0.0
    %2296 = vmatpush1.msra.mxu0 %v465
    %2297 = vmatprep.subr.mxu0 0.0
    %2298 = vmatpush1.msra.mxu0 %v466
    %2299 = vmatprep.subr.mxu0 0.0
    %2300 = vmatpush1.msra.mxu0 %v467
    %2301 = vmatprep.subr.mxu0 0.0
    %2302 = vmatpush1.msra.mxu0 %v468
    %2303 = vmatprep.subr.mxu0 0.0
    %2304 = vmatpush1.msra.mxu0 %v469
    %2305 = vmatprep.subr.mxu0 0.0
    %2306 = vmatpush1.msra.mxu0 %v470
    %2307 = vmatprep.subr.mxu0 0.0
    %2308 = vmatpush1.msra.mxu0 %v471
    %2309 = vmatprep.subr.mxu0 0.0
    %2310 = vmatpush1.msra.mxu0 %v472
    %2311 = vmatprep.subr.mxu0 0.0
    %2312 = vmatpush1.msra.mxu0 %v473
    %2313 = vmatprep.subr.mxu0 0.0
    %2314 = vmatpush1.msra.mxu0 %v474
    %2315 = vmatprep.subr.mxu0 0.0
    %2316 = vmatpush1.msra.mxu0 %v475
    %2317 = vmatprep.subr.mxu0 0.0
    %2318 = vmatpush1.msra.mxu0 %v476
    %2319 = vmatprep.subr.mxu0 0.0
    %2320 = vmatpush1.msra.mxu0 %v477
    %2321 = vmatprep.subr.mxu0 0.0
    %2322 = vmatpush1.msra.mxu0 %v478
    %2323 = vmatprep.subr.mxu0 0.0
    %2324 = vmatpush1.msra.mxu0 %v479
    %2325 = vmatprep.subr.mxu0 0.0
    %2326 = vmatpush1.msra.mxu0 %v480
    %2327 = vmatprep.subr.mxu0 0.0
    %2328 = vmatpush1.msra.mxu0 %v481
    %2329 = vmatprep.subr.mxu0 0.0
    %2330 = vmatpush1.msra.mxu0 %v482
    %2331 = vmatprep.subr.mxu0 0.0
    %2332 = vmatpush1.msra.mxu0 %v483
    %2333 = vmatprep.subr.mxu0 0.0
    %2334 = vmatpush1.msra.mxu0 %v484
    %2335 = vmatprep.mubr.f32.mxu0 %v859
    %2336 = vmatmul.mubr.f32.gmra.mrb[0].mxu0 %v858
    %v2337 = vpop.f32.mrb[0].mxu0
    %v2338 = vadd.f32 %v2253, %v2337
    %v2339 = vpop.f32.mrb[0].mxu0
    %2340 = vmatprep.mubr.f32.mxu0 %v1075
    %2341 = vmatmul.mubr.f32.gmra.mrb[0].mxu0 %v1074
    %v2342 = vpop.f32.mrb[0].mxu0
    %v2343 = vadd.f32 %v2258, %v2342
    %v2344 = vpop.f32.mrb[0].mxu0
    %2345 = vmatprep.mubr.f32.mxu0 %v1291
    %2346 = vmatmul.mubr.f32.gmra.mrb[0].mxu0 %v1290
    %v2347 = vpop.f32.mrb[0].mxu0
    %v2348 = vadd.f32 %v2263, %v2347
    %v2349 = vpop.f32.mrb[0].mxu0
    %2350 = vmatprep.mubr.f32.mxu0 %v1507
    %2351 = vmatmul.mubr.f32.gmra.mrb[0].mxu0 %v1506
    %v2352 = vpop.f32.mrb[0].mxu0
    %v2353 = vadd.f32 %v2268, %v2352
    %v2354 = vpop.f32.mrb[0].mxu0
    %2355 = vdwg.mxu0
    %2356 = vmatprep.subr.mxu0 0.0
    %2357 = vmatpush1.msra.mxu0 %v485
    %2358 = vmatprep.subr.mxu0 0.0
    %2359 = vmatpush1.msra.mxu0 %v486
    %2360 = vmatprep.subr.mxu0 0.0
    %2361 = vmatpush1.msra.mxu0 %v487
    %2362 = vmatprep.subr.mxu0 0.0
    %2363 = vmatpush1.msra.mxu0 %v488
    %2364 = vmatprep.subr.mxu0 0.0
    %2365 = vmatpush1.msra.mxu0 %v489
    %2366 = vmatprep.subr.mxu0 0.0
    %2367 = vmatpush1.msra.mxu0 %v490
    %2368 = vmatprep.subr.mxu0 0.0
    %2369 = vmatpush1.msra.mxu0 %v491
    %2370 = vmatprep.subr.mxu0 0.0
    %2371 = vmatpush1.msra.mxu0 %v492
    %2372 = vmatprep.subr.mxu0 0.0
    %2373 = vmatpush1.msra.mxu0 %v493
    %2374 = vmatprep.subr.mxu0 0.0
    %2375 = vmatpush1.msra.mxu0 %v494
    %2376 = vmatprep.subr.mxu0 0.0
    %2377 = vmatpush1.msra.mxu0 %v495
    %2378 = vmatprep.subr.mxu0 0.0
    %2379 = vmatpush1.msra.mxu0 %v496
    %2380 = vmatprep.subr.mxu0 0.0
    %2381 = vmatpush1.msra.mxu0 %v497
    %2382 = vmatprep.subr.mxu0 0.0
    %2383 = vmatpush1.msra.mxu0 %v498
    %2384 = vmatprep.subr.mxu0 0.0
    %2385 = vmatpush1.msra.mxu0 %v499
    %2386 = vmatprep.subr.mxu0 0.0
    %2387 = vmatpush1.msra.mxu0 %v500
    %2388 = vmatprep.subr.mxu0 0.0
    %2389 = vmatpush1.msra.mxu0 %v501
    %2390 = vmatprep.subr.mxu0 0.0
    %2391 = vmatpush1.msra.mxu0 %v502
    %2392 = vmatprep.subr.mxu0 0.0
    %2393 = vmatpush1.msra.mxu0 %v503
    %2394 = vmatprep.subr.mxu0 0.0
    %2395 = vmatpush1.msra.mxu0 %v504
    %2396 = vmatprep.subr.mxu0 0.0
    %2397 = vmatpush1.msra.mxu0 %v505
    %2398 = vmatprep.subr.mxu0 0.0
    %2399 = vmatpush1.msra.mxu0 %v506
    %2400 = vmatprep.subr.mxu0 0.0
    %2401 = vmatpush1.msra.mxu0 %v507
    %2402 = vmatprep.subr.mxu0 0.0
    %2403 = vmatpush1.msra.mxu0 %v508
    %2404 = vmatprep.subr.mxu0 0.0
    %2405 = vmatpush1.msra.mxu0 %v509
    %2406 = vmatprep.subr.mxu0 0.0
    %2407 = vmatpush1.msra.mxu0 %v510
    %2408 = vmatprep.subr.mxu0 0.0
    %2409 = vmatpush1.msra.mxu0 %v511
    %2410 = vmatprep.subr.mxu0 0.0
    %2411 = vmatpush1.msra.mxu0 %v512
    %2412 = vmatprep.subr.mxu0 0.0
    %2413 = vmatpush1.msra.mxu0 %v513
    %2414 = vmatprep.subr.mxu0 0.0
    %2415 = vmatpush1.msra.mxu0 %v514
    %2416 = vmatprep.subr.mxu0 0.0
    %2417 = vmatpush1.msra.mxu0 %v515
    %2418 = vmatprep.subr.mxu0 0.0
    %2419 = vmatpush1.msra.mxu0 %v516
    %2420 = vmatprep.mubr.f32.mxu0 %v893
    %2421 = vmatmul.mubr.f32.gmra.mrb[0].mxu0 %v892
    %v2422 = vpop.f32.mrb[0].mxu0
    %v2423 = vadd.f32 %v2338, %v2422
    %v2424 = vpop.f32.mrb[0].mxu0
    %2425 = vmatprep.mubr.f32.mxu0 %v1109
    %2426 = vmatmul.mubr.f32.gmra.mrb[0].mxu0 %v1108
    %v2427 = vpop.f32.mrb[0].mxu0
    %v2428 = vadd.f32 %v2343, %v2427
    %v2429 = vpop.f32.mrb[0].mxu0
    %2430 = vmatprep.mubr.f32.mxu0 %v1325
    %2431 = vmatmul.mubr.f32.gmra.mrb[0].mxu0 %v1324
    %v2432 = vpop.f32.mrb[0].mxu0
    %v2433 = vadd.f32 %v2348, %v2432
    %v2434 = vpop.f32.mrb[0].mxu0
    %2435 = vmatprep.mubr.f32.mxu0 %v1541
    %2436 = vmatmul.mubr.f32.gmra.mrb[0].mxu0 %v1540
    %v2437 = vpop.f32.mrb[0].mxu0
    %v2438 = vadd.f32 %v2353, %v2437
    %v2439 = vpop.f32.mrb[0].mxu0
    %2440 = vdwg.mxu0
    %2441 = vmatprep.subr.mxu0 0.0
    %2442 = vmatpush1.msra.mxu0 %v517
    %2443 = vmatprep.subr.mxu0 0.0
    %2444 = vmatpush1.msra.mxu0 %v518
    %2445 = vmatprep.subr.mxu0 0.0
    %2446 = vmatpush1.msra.mxu0 %v519
    %2447 = vmatprep.subr.mxu0 0.0
    %2448 = vmatpush1.msra.mxu0 %v520
    %2449 = vmatprep.subr.mxu0 0.0
    %2450 = vmatpush1.msra.mxu0 %v521
    %2451 = vmatprep.subr.mxu0 0.0
    %2452 = vmatpush1.msra.mxu0 %v522
    %2453 = vmatprep.subr.mxu0 0.0
    %2454 = vmatpush1.msra.mxu0 %v523
    %2455 = vmatprep.subr.mxu0 0.0
    %2456 = vmatpush1.msra.mxu0 %v524
    %2457 = vmatprep.subr.mxu0 0.0
    %2458 = vmatpush1.msra.mxu0 %v525
    %2459 = vmatprep.subr.mxu0 0.0
    %2460 = vmatpush1.msra.mxu0 %v526
    %2461 = vmatprep.subr.mxu0 0.0
    %2462 = vmatpush1.msra.mxu0 %v527
    %2463 = vmatprep.subr.mxu0 0.0
    %2464 = vmatpush1.msra.mxu0 %v528
    %2465 = vmatprep.subr.mxu0 0.0
    %2466 = vmatpush1.msra.mxu0 %v529
    %2467 = vmatprep.subr.mxu0 0.0
    %2468 = vmatpush1.msra.mxu0 %v530
    %2469 = vmatprep.subr.mxu0 0.0
    %2470 = vmatpush1.msra.mxu0 %v531
    %2471 = vmatprep.subr.mxu0 0.0
    %2472 = vmatpush1.msra.mxu0 %v532
    %2473 = vmatprep.subr.mxu0 0.0
    %2474 = vmatpush1.msra.mxu0 %v533
    %2475 = vmatprep.subr.mxu0 0.0
    %2476 = vmatpush1.msra.mxu0 %v534
    %2477 = vmatprep.subr.mxu0 0.0
    %2478 = vmatpush1.msra.mxu0 %v535
    %2479 = vmatprep.subr.mxu0 0.0
    %2480 = vmatpush1.msra.mxu0 %v536
    %2481 = vmatprep.subr.mxu0 0.0
    %2482 = vmatpush1.msra.mxu0 %v537
    %2483 = vmatprep.subr.mxu0 0.0
    %2484 = vmatpush1.msra.mxu0 %v538
    %2485 = vmatprep.subr.mxu0 0.0
    %2486 = vmatpush1.msra.mxu0 %v539
    %2487 = vmatprep.subr.mxu0 0.0
    %2488 = vmatpush1.msra.mxu0 %v540
    %2489 = vmatprep.subr.mxu0 0.0
    %2490 = vmatpush1.msra.mxu0 %v541
    %2491 = vmatprep.subr.mxu0 0.0
    %2492 = vmatpush1.msra.mxu0 %v542
    %2493 = vmatprep.subr.mxu0 0.0
    %2494 = vmatpush1.msra.mxu0 %v543
    %2495 = vmatprep.subr.mxu0 0.0
    %2496 = vmatpush1.msra.mxu0 %v544
    %2497 = vmatprep.subr.mxu0 0.0
    %2498 = vmatpush1.msra.mxu0 %v545
    %2499 = vmatprep.subr.mxu0 0.0
    %2500 = vmatpush1.msra.mxu0 %v546
    %2501 = vmatprep.subr.mxu0 0.0
    %2502 = vmatpush1.msra.mxu0 %v547
    %2503 = vmatprep.subr.mxu0 0.0
    %2504 = vmatpush1.msra.mxu0 %v548
    %2505 = vmatprep.mubr.f32.mxu0 %v895
    %2506 = vmatmul.mubr.f32.gmra.mrb[0].mxu0 %v894
    %v2507 = vpop.f32.mrb[0].mxu0
    %v2508 = vadd.f32 %v2423, %v2507
    %v2509 = vpop.f32.mrb[0].mxu0
    %2510 = vmatprep.mubr.f32.mxu0 %v1111
    %2511 = vmatmul.mubr.f32.gmra.mrb[0].mxu0 %v1110
    %v2512 = vpop.f32.mrb[0].mxu0
    %v2513 = vadd.f32 %v2428, %v2512
    %v2514 = vpop.f32.mrb[0].mxu0
    %2515 = vmatprep.mubr.f32.mxu0 %v1327
    %2516 = vmatmul.mubr.f32.gmra.mrb[0].mxu0 %v1326
    %v2517 = vpop.f32.mrb[0].mxu0
    %v2518 = vadd.f32 %v2433, %v2517
    %v2519 = vpop.f32.mrb[0].mxu0
    %2520 = vmatprep.mubr.f32.mxu0 %v1543
    %2521 = vmatmul.mubr.f32.gmra.mrb[0].mxu0 %v1542
    %v2522 = vpop.f32.mrb[0].mxu0
    %v2523 = vadd.f32 %v2438, %v2522
    %v2524 = vpop.f32.mrb[0].mxu0
    %2525 = vdwg.mxu0
    %2526 = vmatprep.subr.mxu0 0.0
    %2527 = vmatpush1.msra.mxu0 %v549
    %2528 = vmatprep.subr.mxu0 0.0
    %2529 = vmatpush1.msra.mxu0 %v550
    %2530 = vmatprep.subr.mxu0 0.0
    %2531 = vmatpush1.msra.mxu0 %v551
    %2532 = vmatprep.subr.mxu0 0.0
    %2533 = vmatpush1.msra.mxu0 %v552
    %2534 = vmatprep.subr.mxu0 0.0
    %2535 = vmatpush1.msra.mxu0 %v553
    %2536 = vmatprep.subr.mxu0 0.0
    %2537 = vmatpush1.msra.mxu0 %v554
    %2538 = vmatprep.subr.mxu0 0.0
    %2539 = vmatpush1.msra.mxu0 %v555
    %2540 = vmatprep.subr.mxu0 0.0
    %2541 = vmatpush1.msra.mxu0 %v556
    %2542 = vmatprep.subr.mxu0 0.0
    %2543 = vmatpush1.msra.mxu0 %v557
    %2544 = vmatprep.subr.mxu0 0.0
    %2545 = vmatpush1.msra.mxu0 %v558
    %2546 = vmatprep.subr.mxu0 0.0
    %2547 = vmatpush1.msra.mxu0 %v559
    %2548 = vmatprep.subr.mxu0 0.0
    %2549 = vmatpush1.msra.mxu0 %v560
    %2550 = vmatprep.subr.mxu0 0.0
    %2551 = vmatpush1.msra.mxu0 %v561
    %2552 = vmatprep.subr.mxu0 0.0
    %2553 = vmatpush1.msra.mxu0 %v562
    %2554 = vmatprep.subr.mxu0 0.0
    %2555 = vmatpush1.msra.mxu0 %v563
    %2556 = vmatprep.subr.mxu0 0.0
    %2557 = vmatpush1.msra.mxu0 %v564
    %2558 = vmatprep.subr.mxu0 0.0
    %2559 = vmatpush1.msra.mxu0 %v565
    %2560 = vmatprep.subr.mxu0 0.0
    %2561 = vmatpush1.msra.mxu0 %v566
    %2562 = vmatprep.subr.mxu0 0.0
    %2563 = vmatpush1.msra.mxu0 %v567
    %2564 = vmatprep.subr.mxu0 0.0
    %2565 = vmatpush1.msra.mxu0 %v568
    %2566 = vmatprep.subr.mxu0 0.0
    %2567 = vmatpush1.msra.mxu0 %v569
    %2568 = vmatprep.subr.mxu0 0.0
    %2569 = vmatpush1.msra.mxu0 %v570
    %2570 = vmatprep.subr.mxu0 0.0
    %2571 = vmatpush1.msra.mxu0 %v571
    %2572 = vmatprep.subr.mxu0 0.0
    %2573 = vmatpush1.msra.mxu0 %v572
    %2574 = vmatprep.subr.mxu0 0.0
    %2575 = vmatpush1.msra.mxu0 %v573
    %2576 = vmatprep.subr.mxu0 0.0
    %2577 = vmatpush1.msra.mxu0 %v574
    %2578 = vmatprep.subr.mxu0 0.0
    %2579 = vmatpush1.msra.mxu0 %v575
    %2580 = vmatprep.subr.mxu0 0.0
    %2581 = vmatpush1.msra.mxu0 %v576
    %2582 = vmatprep.subr.mxu0 0.0
    %2583 = vmatpush1.msra.mxu0 %v577
    %2584 = vmatprep.subr.mxu0 0.0
    %2585 = vmatpush1.msra.mxu0 %v578
    %2586 = vmatprep.subr.mxu0 0.0
    %2587 = vmatpush1.msra.mxu0 %v579
    %2588 = vmatprep.subr.mxu0 0.0
    %2589 = vmatpush1.msra.mxu0 %v580
    %2590 = vmatprep.mubr.f32.mxu0 %v929
    %2591 = vmatmul.mubr.f32.gmra.mrb[0].mxu0 %v928
    %v2592 = vpop.f32.mrb[0].mxu0
    %v2593 = vadd.f32 %v2508, %v2592
    %v2594 = vpop.f32.mrb[0].mxu0
    %2595 = vmatprep.mubr.f32.mxu0 %v1145
    %2596 = vmatmul.mubr.f32.gmra.mrb[0].mxu0 %v1144
    %v2597 = vpop.f32.mrb[0].mxu0
    %v2598 = vadd.f32 %v2513, %v2597
    %v2599 = vpop.f32.mrb[0].mxu0
    %2600 = vmatprep.mubr.f32.mxu0 %v1361
    %2601 = vmatmul.mubr.f32.gmra.mrb[0].mxu0 %v1360
    %v2602 = vpop.f32.mrb[0].mxu0
    %v2603 = vadd.f32 %v2518, %v2602
    %v2604 = vpop.f32.mrb[0].mxu0
    %2605 = vmatprep.mubr.f32.mxu0 %v1577
    %2606 = vmatmul.mubr.f32.gmra.mrb[0].mxu0 %v1576
    %v2607 = vpop.f32.mrb[0].mxu0
    %v2608 = vadd.f32 %v2523, %v2607
    %v2609 = vpop.f32.mrb[0].mxu0
    %2610 = vdwg.mxu0
    %2611 = vmatprep.subr.mxu0 0.0
    %2612 = vmatpush1.msra.mxu0 %v581
    %2613 = vmatprep.subr.mxu0 0.0
    %2614 = vmatpush1.msra.mxu0 %v582
    %2615 = vmatprep.subr.mxu0 0.0
    %2616 = vmatpush1.msra.mxu0 %v583
    %2617 = vmatprep.subr.mxu0 0.0
    %2618 = vmatpush1.msra.mxu0 %v584
    %2619 = vmatprep.subr.mxu0 0.0
    %2620 = vmatpush1.msra.mxu0 %v585
    %2621 = vmatprep.subr.mxu0 0.0
    %2622 = vmatpush1.msra.mxu0 %v586
    %2623 = vmatprep.subr.mxu0 0.0
    %2624 = vmatpush1.msra.mxu0 %v587
    %2625 = vmatprep.subr.mxu0 0.0
    %2626 = vmatpush1.msra.mxu0 %v588
    %2627 = vmatprep.subr.mxu0 0.0
    %2628 = vmatpush1.msra.mxu0 %v589
    %2629 = vmatprep.subr.mxu0 0.0
    %2630 = vmatpush1.msra.mxu0 %v590
    %2631 = vmatprep.subr.mxu0 0.0
    %2632 = vmatpush1.msra.mxu0 %v591
    %2633 = vmatprep.subr.mxu0 0.0
    %2634 = vmatpush1.msra.mxu0 %v592
    %2635 = vmatprep.subr.mxu0 0.0
    %2636 = vmatpush1.msra.mxu0 %v593
    %2637 = vmatprep.subr.mxu0 0.0
    %2638 = vmatpush1.msra.mxu0 %v594
    %2639 = vmatprep.subr.mxu0 0.0
    %2640 = vmatpush1.msra.mxu0 %v595
    %2641 = vmatprep.subr.mxu0 0.0
    %2642 = vmatpush1.msra.mxu0 %v596
    %2643 = vmatprep.subr.mxu0 0.0
    %2644 = vmatpush1.msra.mxu0 %v597
    %2645 = vmatprep.subr.mxu0 0.0
    %2646 = vmatpush1.msra.mxu0 %v598
    %2647 = vmatprep.subr.mxu0 0.0
    %2648 = vmatpush1.msra.mxu0 %v599
    %2649 = vmatprep.subr.mxu0 0.0
    %2650 = vmatpush1.msra.mxu0 %v600
    %2651 = vmatprep.subr.mxu0 0.0
    %2652 = vmatpush1.msra.mxu0 %v601
    %2653 = vmatprep.subr.mxu0 0.0
    %2654 = vmatpush1.msra.mxu0 %v602
    %2655 = vmatprep.subr.mxu0 0.0
    %2656 = vmatpush1.msra.mxu0 %v603
    %2657 = vmatprep.subr.mxu0 0.0
    %2658 = vmatpush1.msra.mxu0 %v604
    %2659 = vmatprep.subr.mxu0 0.0
    %2660 = vmatpush1.msra.mxu0 %v605
    %2661 = vmatprep.subr.mxu0 0.0
    %2662 = vmatpush1.msra.mxu0 %v606
    %2663 = vmatprep.subr.mxu0 0.0
    %2664 = vmatpush1.msra.mxu0 %v607
    %2665 = vmatprep.subr.mxu0 0.0
    %2666 = vmatpush1.msra.mxu0 %v608
    %2667 = vmatprep.subr.mxu0 0.0
    %2668 = vmatpush1.msra.mxu0 %v609
    %2669 = vmatprep.subr.mxu0 0.0
    %2670 = vmatpush1.msra.mxu0 %v610
    %2671 = vmatprep.subr.mxu0 0.0
    %2672 = vmatpush1.msra.mxu0 %v611
    %2673 = vmatprep.subr.mxu0 0.0
    %2674 = vmatpush1.msra.mxu0 %v612
    %2675 = vmatprep.mubr.f32.mxu0 %v931
    %2676 = vmatmul.mubr.f32.gmra.mrb[0].mxu0 %v930
    %v2677 = vpop.f32.mrb[0].mxu0
    %v2678 = vadd.f32 %v2593, %v2677
    %v2679 = vpop.f32.mrb[0].mxu0
    %2680 = vmatprep.mubr.f32.mxu0 %v1147
    %2681 = vmatmul.mubr.f32.gmra.mrb[0].mxu0 %v1146
    %v2682 = vpop.f32.mrb[0].mxu0
    %v2683 = vadd.f32 %v2598, %v2682
    %v2684 = vpop.f32.mrb[0].mxu0
    %2685 = vmatprep.mubr.f32.mxu0 %v1363
    %2686 = vmatmul.mubr.f32.gmra.mrb[0].mxu0 %v1362
    %v2687 = vpop.f32.mrb[0].mxu0
    %v2688 = vadd.f32 %v2603, %v2687
    %v2689 = vpop.f32.mrb[0].mxu0
    %2690 = vmatprep.mubr.f32.mxu0 %v1579
    %2691 = vmatmul.mubr.f32.gmra.mrb[0].mxu0 %v1578
    %v2692 = vpop.f32.mrb[0].mxu0
    %v2693 = vadd.f32 %v2608, %v2692
    %v2694 = vpop.f32.mrb[0].mxu0
    %2695 = vdwg.mxu0
    %v2696 = vmax.f32 %v2678, 0.0
    %v2697 = vmax.f32 %v2683, 0.0
    %v2698 = vmax.f32 %v2688, 0.0
    %v2699 = vmax.f32 %v2693, 0.0
    %v2700 = vld [vmem:[#allocation8] sm:$0xff]
    %v2701 = vld [vmem:[#allocation8 + $0x8] sm:$0xff]
    %v2702 = vld [vmem:[#allocation8 + $0x10] sm:$0xff]
    %v2703 = vld [vmem:[#allocation8 + $0x18] sm:$0xff]
    %v2704 = vld [vmem:[#allocation8 + $0x20] sm:$0xff]
    %v2705 = vld [vmem:[#allocation8 + $0x28] sm:$0xff]
    %v2706 = vld [vmem:[#allocation8 + $0x30] sm:$0xff]
    %v2707 = vld [vmem:[#allocation8 + $0x38] sm:$0xff]
    %v2708 = vld [vmem:[#allocation8 + $0x40] sm:$0xff]
    %v2709 = vld [vmem:[#allocation8 + $0x48] sm:$0xff]
    %v2710 = vld [vmem:[#allocation8 + $0x50] sm:$0xff]
    %v2711 = vld [vmem:[#allocation8 + $0x58] sm:$0xff]
    %v2712 = vld [vmem:[#allocation8 + $0x60] sm:$0xff]
    %v2713 = vld [vmem:[#allocation8 + $0x68] sm:$0xff]
    %v2714 = vld [vmem:[#allocation8 + $0x70] sm:$0xff]
    %v2715 = vld [vmem:[#allocation8 + $0x78] sm:$0xff]
    %v2716 = vld [vmem:[#allocation10] sm:$0x1]
    %v2718 = vlaneseq
    %v2719 = vshrl.u32 %v2718, 7
    %v2720 = vsub.s32 0, %v2719
    %v2721 = vrot.slane %v2716, %v2720
    %2723 = vmatprep.subr.mxu0 0.0
    %2724 = vmatpush1.msra.mxu0 %v2700
    %2725 = vmatprep.subr.mxu0 0.0
    %2726 = vmatpush1.msra.mxu0 %v2701
    %2727 = vmatprep.subr.mxu0 0.0
    %2728 = vmatpush1.msra.mxu0 %v2702
    %2729 = vmatprep.subr.mxu0 0.0
    %2730 = vmatpush1.msra.mxu0 %v2703
    %2731 = vmatprep.subr.mxu0 0.0
    %2732 = vmatpush1.msra.mxu0 %v2704
    %2733 = vmatprep.subr.mxu0 0.0
    %2734 = vmatpush1.msra.mxu0 %v2705
    %2735 = vmatprep.subr.mxu0 0.0
    %2736 = vmatpush1.msra.mxu0 %v2706
    %2737 = vmatprep.subr.mxu0 0.0
    %2738 = vmatpush1.msra.mxu0 %v2707
    %2739 = vmatprep.subr.mxu0 0.0
    %2740 = vmatpush1.msra.mxu0 %v2708
    %2741 = vmatprep.subr.mxu0 0.0
    %2742 = vmatpush1.msra.mxu0 %v2709
    %2743 = vmatprep.subr.mxu0 0.0
    %2744 = vmatpush1.msra.mxu0 %v2710
    %2745 = vmatprep.subr.mxu0 0.0
    %2746 = vmatpush1.msra.mxu0 %v2711
    %2747 = vmatprep.subr.mxu0 0.0
    %2748 = vmatpush1.msra.mxu0 %v2712
    %2749 = vmatprep.subr.mxu0 0.0
    %2750 = vmatpush1.msra.mxu0 %v2713
    %2751 = vmatprep.subr.mxu0 0.0
    %2752 = vmatpush1.msra.mxu0 %v2714
    %2753 = vmatprep.subr.mxu0 0.0
    %2754 = vmatpush1.msra.mxu0 %v2715
    %2755 = vmatprep.subr.mxu0 0.0
    %2756 = vmatpush1.msra.mxu0 0.0
    %2757 = vmatprep.subr.mxu0 0.0
    %2758 = vmatpush1.msra.mxu0 0.0
    %2759 = vmatprep.subr.mxu0 0.0
    %2760 = vmatpush1.msra.mxu0 0.0
    %2761 = vmatprep.subr.mxu0 0.0
    %2762 = vmatpush1.msra.mxu0 0.0
    %2763 = vmatprep.subr.mxu0 0.0
    %2764 = vmatpush1.msra.mxu0 0.0
    %2765 = vmatprep.subr.mxu0 0.0
    %2766 = vmatpush1.msra.mxu0 0.0
    %2767 = vmatprep.subr.mxu0 0.0
    %2768 = vmatpush1.msra.mxu0 0.0
    %2769 = vmatprep.subr.mxu0 0.0
    %2770 = vmatpush1.msra.mxu0 0.0
    %2771 = vmatprep.subr.mxu0 0.0
    %2772 = vmatpush1.msra.mxu0 0.0
    %2773 = vmatprep.subr.mxu0 0.0
    %2774 = vmatpush1.msra.mxu0 0.0
    %2775 = vmatprep.subr.mxu0 0.0
    %2776 = vmatpush1.msra.mxu0 0.0
    %2777 = vmatprep.subr.mxu0 0.0
    %2778 = vmatpush1.msra.mxu0 0.0
    %2779 = vmatprep.subr.mxu0 0.0
    %2780 = vmatpush1.msra.mxu0 0.0
    %2781 = vmatprep.subr.mxu0 0.0
    %2782 = vmatpush1.msra.mxu0 0.0
    %2783 = vmatprep.subr.mxu0 0.0
    %2784 = vmatpush1.msra.mxu0 0.0
    %2785 = vmatprep.subr.mxu0 0.0
    %2786 = vmatpush1.msra.mxu0 0.0
    %2787 = vmatprep.mubr.f32.mxu0 0.0
    %2788 = vmatmul.mubr.f32.gmra.mrb[0].mxu0 %v2696
    %v2789 = vpop.f32.mrb[0].mxu0
    %v2790 = vadd.f32 %v2721, %v2789
    %v2791 = vpop.f32.mrb[0].mxu0
    %2792 = vmatprep.mubr.f32.mxu0 0.0
    %2793 = vmatmul.mubr.f32.gmra.mrb[0].mxu0 %v2697
    %v2794 = vpop.f32.mrb[0].mxu0
    %v2795 = vadd.f32 %v2721, %v2794
    %v2796 = vpop.f32.mrb[0].mxu0
    %2797 = vmatprep.mubr.f32.mxu0 0.0
    %2798 = vmatmul.mubr.f32.gmra.mrb[0].mxu0 %v2698
    %v2799 = vpop.f32.mrb[0].mxu0
    %v2800 = vadd.f32 %v2721, %v2799
    %v2801 = vpop.f32.mrb[0].mxu0
    %2802 = vmatprep.mubr.f32.mxu0 0.0
    %2803 = vmatmul.mubr.f32.gmra.mrb[0].mxu0 %v2699
    %v2804 = vpop.f32.mrb[0].mxu0
    %v2805 = vadd.f32 %v2721, %v2804
    %v2806 = vpop.f32.mrb[0].mxu0
    %2807 = vdwg.mxu0
    %2808 = vst [vmem:[#allocation11] sm:$0xff] %v2790
    %2809 = vst [vmem:[#allocation11 + $0x8] sm:$0xff] %v2795
    %2810 = vst [vmem:[#allocation11 + $0x10] sm:$0xff] %v2800
    %2811 = vst [vmem:[#allocation11 + $0x18] sm:$0xff] %v2805
    // Predicated region
    $region42: #{tpu_custom_call.1} parent=1 // pred_check
      _
    $region43: #{tpu_custom_call.1} parent=1 // pred_check_branch
      %2813 = sbr.rel (0) target = $region45
    $region44: #{tpu_custom_call.1} parent=1 // pred_region
      %s2815 = ssub.s32 512, 32
      %2816 = vsyncadd [#allocation4], %s2815
      %s2817 = sshll.u32 [#allocation11], 4
      %s2818 = int_to_ptr.vmem [resolvable:$true] %s2817
      %2823 = dma.vmem_to_hbm [thread:$0]  %s2818, 32, %s5, [#allocation4], 32, 32, 2
    $region45: #{tpu_custom_call.1} parent=1 // pred_fallthru
      _
    // Predicated region
    $region46: #{tpu_custom_call.1} parent=1 // pred_check
      _
    $region47: #{tpu_custom_call.1} parent=1 // pred_check_branch
      %2825 = sbr.rel (0) target = $region49
    $region48: #{tpu_custom_call.1} parent=1 // pred_region
      %2826 = dma.done [#allocation4], 512
    $region49: #{tpu_custom_call.1} parent=1 // pred_fallthru
      _
    %2827 = vsyncpa [#allocation3], 1
    %2828 = vsyncpa [#allocation6], 1
    %2829 = vsyncpa [#allocation9], 1
    %2830 = vsyncpa [#allocation4], 1

</llo_original>
